<compile_context>
chip_gen: v6e
topology: v6e:2x2x1
jax: 0.10.0
libtpu: 0.0.40
codegen_flags: <defaults>
</compile_context>

<pallas_src>
import functools

import jax
import jax.numpy as jnp
from jax.experimental import pallas as pl
from jax.experimental.pallas import tpu as pltpu

MIN_TILE_B = 16     # bf16 activations pack 16 rows per sublane group
MAX_TILE_B = 1024   # largest f32 intermediate at 1024 is 4 MiB -> fits 32 MiB VMEM


def _round_up(x, m):
    return -(-x // m) * m


def head_width(action_dim):
    # fused head lanes: [0,A) policy probs, [A] value, [A+1,2A+1) log-probs,
    # rest zero pad; lane-padded to a multiple of 128 for unmasked stores.
    return max(128, _round_up(2 * action_dim + 1, 128))


def actor_critic_kernel(x_ref,
                        w1_ref, s1_ref, b1_ref,
                        w2_ref, s2_ref, b2_ref,
                        w3_ref, s3_ref, b3_ref,
                        w4_ref, s4_ref, b4_ref,
                        wh_ref, sh_ref, bh_ref,
                        out_ref,
                        *, action_dim):
    def qlinear(a, w_ref, s_ref, b_ref):
        # int8 (or bf16) weights -> bf16 on the VPU (exact for |q| <= 127),
        # bf16 MXU matmul with f32 accumulation, then per-output-channel
        # dequant scale + bias applied to the small (tile_b, out) result.
        w = w_ref[...].astype(jnp.bfloat16)
        y = jnp.dot(a, w, preferred_element_type=jnp.float32)
        return y * s_ref[...] + b_ref[...]

    # ---- self.network: Linear->ReLU x3 -> Linear, then F.relu(...) ----
    x = x_ref[...].astype(jnp.bfloat16)
    h = jnp.maximum(qlinear(x, w1_ref, s1_ref, b1_ref), 0.0).astype(jnp.bfloat16)
    h = jnp.maximum(qlinear(h, w2_ref, s2_ref, b2_ref), 0.0).astype(jnp.bfloat16)
    h = jnp.maximum(qlinear(h, w3_ref, s3_ref, b3_ref), 0.0).astype(jnp.bfloat16)
    h = jnp.maximum(qlinear(h, w4_ref, s4_ref, b4_ref), 0.0).astype(jnp.bfloat16)

    # ---- fused policy | value | log-prob head: one lane-padded MXU pass ----
    fused = qlinear(h, wh_ref, sh_ref, bh_ref)          # (tile_b, HEAD) f32

    col = jax.lax.broadcasted_iota(jnp.int32, fused.shape, 1)
    is_policy = col < action_dim
    is_value = col == action_dim
    is_logp = jnp.logical_and(col > action_dim, col < 2 * action_dim + 1)

    # softmax over the policy columns only (padded columns masked out)
    logits = jnp.where(is_policy, fused, -1e30)
    m = jnp.max(logits, axis=-1, keepdims=True)
    e = jnp.exp(logits - m)                              # padded cols -> 0
    denom = jnp.sum(e, axis=-1, keepdims=True)
    inv = 1.0 / denom                                    # exact divide, (tile_b,1)
    lse = m + jnp.log(denom)

    # lane-dense output slab
    out = jnp.where(is_policy, e * inv, 0.0)             # probabilities
    out = jnp.where(is_value, fused, out)                # state value
    out = jnp.where(is_logp, fused - lse, out)           # exact log-probs
    out_ref[...] = out


@functools.partial(jax.jit, static_argnames=("action_dim",))
def actor_critic_forward(state, params, *, action_dim):
    """Fused ActorCritic forward.

    Args:
      state:  (B, input_dim) float32
      params: dict from pack_params (int8/bf16 weights, f32 scales & biases,
              fused lane-padded head).
      action_dim: static python int.

    Returns:
      action_probs: (B, action_dim) float32
      state_value:  (B, 1) float32
      log_probs:    (B, action_dim) float32  (exact log-softmax of the logits)
    """
    B, input_dim = state.shape
    hn = head_width(action_dim)

    # Batch tiling: dense bf16 sublanes at small B; two tiles for B > 64 so
    # v7x's second TensorCore participates; cap at 1024 rows per tile.
    if B <= 64:
        tile_b = max(MIN_TILE_B, _round_up(B, 8))
    else:
        tile_b = min(MAX_TILE_B, _round_up(_round_up(B, 2) // 2, 8))
    Bp = _round_up(B, tile_b)
    if Bp != B:
        state = jnp.pad(state, ((0, Bp - B), (0, 0)))
    grid = (Bp // tile_b,)

    def resident(shape):
        nd = len(shape)
        return pl.BlockSpec(shape, lambda i: (0,) * nd)   # VMEM-resident across grid

    weight_args = (
        params["w1"], params["s1"], params["b1"],
        params["w2"], params["s2"], params["b2"],
        params["w3"], params["s3"], params["b3"],
        params["w4"], params["s4"], params["b4"],
        params["wh"], params["sh"], params["bh"],
    )

    in_specs = [pl.BlockSpec((tile_b, input_dim), lambda i: (i, 0))]
    in_specs += [resident(a.shape) for a in weight_args]

    mm_elems = (input_dim * 512 + 512 * 1024 + 1024 * 512 + 512 * 256 + 256 * hn)
    w_bytes = sum(int(a.size) * a.dtype.itemsize for a in weight_args)
    cost = pl.CostEstimate(
        flops=2 * Bp * mm_elems,
        transcendentals=Bp * (hn + 2),
        bytes_accessed=w_bytes + Bp * (input_dim + hn) * 4,
    )

    out = pl.pallas_call(
        functools.partial(actor_critic_kernel, action_dim=action_dim),
        out_shape=jax.ShapeDtypeStruct((Bp, hn), jnp.float32),
        grid=grid,
        in_specs=in_specs,
        out_specs=pl.BlockSpec((tile_b, hn), lambda i: (i, 0)),
        compiler_params=pltpu.CompilerParams(
            dimension_semantics=("parallel",),
            vmem_limit_bytes=32 << 20,
        ),
        cost_estimate=cost,
    )(state, *weight_args)

    probs = out[:B, :action_dim]
    value = out[:B, action_dim:action_dim + 1]
    log_probs = out[:B, action_dim + 1:2 * action_dim + 1]
    return probs, value, log_probs


def init_params(key, input_dim, action_dim):
    """PyTorch-style init U(-1/sqrt(fan_in), 1/sqrt(fan_in)), f32, (in, out) layout."""
    dims = [
        ("w1", "b1", input_dim, 512),
        ("w2", "b2", 512, 1024),
        ("w3", "b3", 1024, 512),
        ("w4", "b4", 512, 256),
        ("wp", "bp", 256, action_dim),
        ("wv", "bv", 256, 1),
    ]
    params = {}
    for wname, bname, fan_in, fan_out in dims:
        key, kw, kb = jax.random.split(key, 3)
        bound = 1.0 / (fan_in ** 0.5)
        params[wname] = jax.random.uniform(
            kw, (fan_in, fan_out), jnp.float32, minval=-bound, maxval=bound)
        params[bname] = jax.random.uniform(
            kb, (1, fan_out), jnp.float32, minval=-bound, maxval=bound)
    return params


def _quantize_per_channel_int8(w):
    amax = jnp.max(jnp.abs(w), axis=0, keepdims=True)
    scale = jnp.where(amax > 0, amax / 127.0, 1.0)
    q = jnp.clip(jnp.round(w / scale), -127.0, 127.0).astype(jnp.int8)
    return q, scale.astype(jnp.float32)


def pack_params(raw, action_dim, *, weight_dtype=jnp.int8):
    """Kernel params.

    weight_dtype=jnp.int8    : per-output-channel symmetric int8 weights
                               (half the HBM weight bytes of bf16; best for the
                               small-batch, weight-DMA-bound inference path).
    weight_dtype=jnp.bfloat16: no quantization (scales = 1); avoids the
                               per-step in-kernel dequant for huge-batch sweeps.
    """
    hn = head_width(action_dim)

    # Fused lane-padded head: [0,A) policy, [A] value, [A+1,2A+1) policy again
    # (duplicated columns let the kernel emit exact log-probs with no roll).
    wh = jnp.zeros((256, hn), jnp.float32)
    wh = wh.at[:, :action_dim].set(raw["wp"])
    wh = wh.at[:, action_dim].set(raw["wv"][:, 0])
    wh = wh.at[:, action_dim + 1:2 * action_dim + 1].set(raw["wp"])
    bh = jnp.zeros((1, hn), jnp.float32)
    bh = bh.at[0, :action_dim].set(raw["bp"][0])
    bh = bh.at[0, action_dim].set(raw["bv"][0, 0])
    bh = bh.at[0, action_dim + 1:2 * action_dim + 1].set(raw["bp"][0])

    p = {}
    for name, w in (("w1", raw["w1"]), ("w2", raw["w2"]),
                    ("w3", raw["w3"]), ("w4", raw["w4"]), ("wh", wh)):
        sname = "s" + name[1:]
        if weight_dtype == jnp.int8:
            p[name], p[sname] = _quantize_per_channel_int8(w)
        else:
            p[name] = w.astype(jnp.bfloat16)
            p[sname] = jnp.ones((1, w.shape[1]), jnp.float32)
    for name in ("b1", "b2", "b3", "b4"):
        p[name] = raw[name].astype(jnp.float32)
    p["bh"] = bh
    return p


if __name__ == "__main__":
    key = jax.random.PRNGKey(0)
    k_params, k_state, k_sample = jax.random.split(key, 3)

    config = {"input_dim": 32, "action_dim": 16}
    batch = 8

    raw = init_params(k_params, config["input_dim"], config["action_dim"])
    params = pack_params(raw, config["action_dim"])          # int8 weights
    state = jax.random.normal(k_state, (batch, config["input_dim"]), jnp.float32)

    probs, value, log_probs = actor_critic_forward(
        state, params, action_dim=config["action_dim"])
    probs, value, log_probs = jax.block_until_ready((probs, value, log_probs))

    # Glue (outside kernel): Categorical(action_probs).sample() and log_prob,
    # mirroring the PyTorch forward's sampling + memory bookkeeping.  Sampling
    # and the chosen log-prob use the kernel's exact log-probs (no log(0)).
    actions = jax.random.categorical(k_sample, log_probs, axis=-1)
    chosen_logp = jnp.take_along_axis(log_probs, actions[:, None], axis=-1)[:, 0]
    actions, chosen_logp = jax.block_until_ready((actions, chosen_logp))

    # Reference 1: identical quantized / bf16 math in plain JAX (tight check).
    def ref_forward(x, p, action_dim):
        def qlin(a, w, s, b):
            y = jnp.dot(a, w.astype(jnp.bfloat16),
                        preferred_element_type=jnp.float32)
            return y * s + b
        h = x.astype(jnp.bfloat16)
        h = jnp.maximum(qlin(h, p["w1"], p["s1"], p["b1"]), 0.0).astype(jnp.bfloat16)
        h = jnp.maximum(qlin(h, p["w2"], p["s2"], p["b2"]), 0.0).astype(jnp.bfloat16)
        h = jnp.maximum(qlin(h, p["w3"], p["s3"], p["b3"]), 0.0).astype(jnp.bfloat16)
        h = jnp.maximum(qlin(h, p["w4"], p["s4"], p["b4"]), 0.0).astype(jnp.bfloat16)
        fused = qlin(h, p["wh"], p["sh"], p["bh"])
        logits = fused[:, :action_dim]
        return (jax.nn.softmax(logits, axis=-1),
                fused[:, action_dim:action_dim + 1],
                jax.nn.log_softmax(logits, axis=-1))

    r_probs, r_value, r_logp = ref_forward(state, params, config["action_dim"])
    assert jnp.allclose(probs, r_probs, atol=2e-3, rtol=2e-3)
    assert jnp.allclose(value, r_value, atol=2e-3, rtol=2e-3)
    assert jnp.allclose(log_probs, r_logp, atol=2e-3, rtol=2e-3)
    assert jnp.allclose(jnp.sum(probs, axis=-1), 1.0, atol=1e-4)
    assert bool(jnp.all(jnp.isfinite(chosen_logp)))

    # Reference 2: original f32 math (loose sanity check on the int8/bf16 trade).
    def ref_f32(x, p):
        h = jnp.maximum(x @ p["w1"] + p["b1"], 0.0)
        h = jnp.maximum(h @ p["w2"] + p["b2"], 0.0)
        h = jnp.maximum(h @ p["w3"] + p["b3"], 0.0)
        h = jnp.maximum(h @ p["w4"] + p["b4"], 0.0)
        return jax.nn.softmax(h @ p["wp"] + p["bp"], -1), h @ p["wv"] + p["bv"]

    f_probs, f_value = ref_f32(state, raw)
    assert jnp.allclose(probs, f_probs, atol=0.03)
    assert jnp.allclose(value, f_value, atol=0.05)

    print("KERNEL_OK")
</pallas_src>

<mosaic_0001>
module attributes {stable_mosaic.version = 11 : i64} {
  func.func @actor_critic_kernel(%arg0: i32, %arg1: memref<16x32xf32, #tpu.memory_space<vmem>>, %arg2: memref<32x512xi8, #tpu.memory_space<vmem>>, %arg3: memref<1x512xf32, #tpu.memory_space<vmem>>, %arg4: memref<1x512xf32, #tpu.memory_space<vmem>>, %arg5: memref<512x1024xi8, #tpu.memory_space<vmem>>, %arg6: memref<1x1024xf32, #tpu.memory_space<vmem>>, %arg7: memref<1x1024xf32, #tpu.memory_space<vmem>>, %arg8: memref<1024x512xi8, #tpu.memory_space<vmem>>, %arg9: memref<1x512xf32, #tpu.memory_space<vmem>>, %arg10: memref<1x512xf32, #tpu.memory_space<vmem>>, %arg11: memref<512x256xi8, #tpu.memory_space<vmem>>, %arg12: memref<1x256xf32, #tpu.memory_space<vmem>>, %arg13: memref<1x256xf32, #tpu.memory_space<vmem>>, %arg14: memref<256x128xi8, #tpu.memory_space<vmem>>, %arg15: memref<1x128xf32, #tpu.memory_space<vmem>>, %arg16: memref<1x128xf32, #tpu.memory_space<vmem>>, %arg17: memref<16x128xf32, #tpu.memory_space<vmem>>) attributes {dimension_semantics = [#tpu.dimension_semantics<parallel>], iteration_bounds = array<i64: 1>, scalar_prefetch = 0 : i64, scratch_operands = 0 : i64, tpu.core_type = #tpu.core_type<tc>, window_params = [{transform_indices = @transform_0, window_bounds = array<i64: 16, 32>}, {pipeline_mode = #tpu.pipeline_mode<synchronous>, transform_indices = @transform_1, window_bounds = array<i64: 32, 512>}, {pipeline_mode = #tpu.pipeline_mode<synchronous>, transform_indices = @transform_2, window_bounds = array<i64: 1, 512>}, {pipeline_mode = #tpu.pipeline_mode<synchronous>, transform_indices = @transform_3, window_bounds = array<i64: 1, 512>}, {pipeline_mode = #tpu.pipeline_mode<synchronous>, transform_indices = @transform_4, window_bounds = array<i64: 512, 1024>}, {pipeline_mode = #tpu.pipeline_mode<synchronous>, transform_indices = @transform_5, window_bounds = array<i64: 1, 1024>}, {pipeline_mode = #tpu.pipeline_mode<synchronous>, transform_indices = @transform_6, window_bounds = array<i64: 1, 1024>}, {pipeline_mode = #tpu.pipeline_mode<synchronous>, transform_indices = @transform_7, window_bounds = array<i64: 1024, 512>}, {pipeline_mode = #tpu.pipeline_mode<synchronous>, transform_indices = @transform_8, window_bounds = array<i64: 1, 512>}, {pipeline_mode = #tpu.pipeline_mode<synchronous>, transform_indices = @transform_9, window_bounds = array<i64: 1, 512>}, {pipeline_mode = #tpu.pipeline_mode<synchronous>, transform_indices = @transform_10, window_bounds = array<i64: 512, 256>}, {pipeline_mode = #tpu.pipeline_mode<synchronous>, transform_indices = @transform_11, window_bounds = array<i64: 1, 256>}, {pipeline_mode = #tpu.pipeline_mode<synchronous>, transform_indices = @transform_12, window_bounds = array<i64: 1, 256>}, {pipeline_mode = #tpu.pipeline_mode<synchronous>, transform_indices = @transform_13, window_bounds = array<i64: 256, 128>}, {pipeline_mode = #tpu.pipeline_mode<synchronous>, transform_indices = @transform_14, window_bounds = array<i64: 1, 128>}, {pipeline_mode = #tpu.pipeline_mode<synchronous>, transform_indices = @transform_15, window_bounds = array<i64: 1, 128>}, {transform_indices = @transform_16, window_bounds = array<i64: 16, 128>}]} {
    %c0 = arith.constant 0 : index
    %c0_0 = arith.constant 0 : index
    %0 = vector.load %arg1[%c0, %c0_0] : memref<16x32xf32, #tpu.memory_space<vmem>>, vector<16x32xf32>
    %1 = arith.truncf %0 : vector<16x32xf32> to vector<16x32xbf16>
    %c0_1 = arith.constant 0 : index
    %c0_2 = arith.constant 0 : index
    %2 = vector.load %arg2[%c0_1, %c0_2] : memref<32x512xi8, #tpu.memory_space<vmem>>, vector<32x512xi8>
    %3 = arith.sitofp %2 : vector<32x512xi8> to vector<32x512xbf16>
    %cst = arith.constant dense<0.000000e+00> : vector<16x512xf32>
    %4 = tpu.matmul %1, %3, %cst {dimension_numbers = #tpu.dot_dimension_numbers<[1], [0], [0], [1], [0, 0, 1, 1], [], []>} : vector<16x32xbf16>, vector<32x512xbf16>, vector<16x512xf32> -> vector<16x512xf32>
    %c0_3 = arith.constant 0 : index
    %c0_4 = arith.constant 0 : index
    %5 = vector.load %arg3[%c0_3, %c0_4] : memref<1x512xf32, #tpu.memory_space<vmem>>, vector<1x512xf32>
    %6 = vector.broadcast %5 : vector<1x512xf32> to vector<16x512xf32>
    %7 = arith.mulf %4, %6 : vector<16x512xf32>
    %c0_5 = arith.constant 0 : index
    %c0_6 = arith.constant 0 : index
    %8 = vector.load %arg4[%c0_5, %c0_6] : memref<1x512xf32, #tpu.memory_space<vmem>>, vector<1x512xf32>
    %9 = vector.broadcast %8 : vector<1x512xf32> to vector<16x512xf32>
    %10 = arith.addf %7, %9 : vector<16x512xf32>
    %cst_7 = arith.constant 0.000000e+00 : f32
    %11 = vector.broadcast %cst_7 : f32 to vector<16x512xf32>
    %12 = arith.maximumf %10, %11 : vector<16x512xf32>
    %13 = arith.truncf %12 : vector<16x512xf32> to vector<16x512xbf16>
    %c0_8 = arith.constant 0 : index
    %c0_9 = arith.constant 0 : index
    %14 = vector.load %arg5[%c0_8, %c0_9] : memref<512x1024xi8, #tpu.memory_space<vmem>>, vector<512x1024xi8>
    %15 = arith.sitofp %14 : vector<512x1024xi8> to vector<512x1024xbf16>
    %cst_10 = arith.constant dense<0.000000e+00> : vector<16x1024xf32>
    %16 = tpu.matmul %13, %15, %cst_10 {dimension_numbers = #tpu.dot_dimension_numbers<[1], [0], [0], [1], [0, 0, 1, 1], [], []>} : vector<16x512xbf16>, vector<512x1024xbf16>, vector<16x1024xf32> -> vector<16x1024xf32>
    %c0_11 = arith.constant 0 : index
    %c0_12 = arith.constant 0 : index
    %17 = vector.load %arg6[%c0_11, %c0_12] : memref<1x1024xf32, #tpu.memory_space<vmem>>, vector<1x1024xf32>
    %18 = vector.broadcast %17 : vector<1x1024xf32> to vector<16x1024xf32>
    %19 = arith.mulf %16, %18 : vector<16x1024xf32>
    %c0_13 = arith.constant 0 : index
    %c0_14 = arith.constant 0 : index
    %20 = vector.load %arg7[%c0_13, %c0_14] : memref<1x1024xf32, #tpu.memory_space<vmem>>, vector<1x1024xf32>
    %21 = vector.broadcast %20 : vector<1x1024xf32> to vector<16x1024xf32>
    %22 = arith.addf %19, %21 : vector<16x1024xf32>
    %cst_15 = arith.constant 0.000000e+00 : f32
    %23 = vector.broadcast %cst_15 : f32 to vector<16x1024xf32>
    %24 = arith.maximumf %22, %23 : vector<16x1024xf32>
    %25 = arith.truncf %24 : vector<16x1024xf32> to vector<16x1024xbf16>
    %c0_16 = arith.constant 0 : index
    %c0_17 = arith.constant 0 : index
    %26 = vector.load %arg8[%c0_16, %c0_17] : memref<1024x512xi8, #tpu.memory_space<vmem>>, vector<1024x512xi8>
    %27 = arith.sitofp %26 : vector<1024x512xi8> to vector<1024x512xbf16>
    %cst_18 = arith.constant dense<0.000000e+00> : vector<16x512xf32>
    %28 = tpu.matmul %25, %27, %cst_18 {dimension_numbers = #tpu.dot_dimension_numbers<[1], [0], [0], [1], [0, 0, 1, 1], [], []>} : vector<16x1024xbf16>, vector<1024x512xbf16>, vector<16x512xf32> -> vector<16x512xf32>
    %c0_19 = arith.constant 0 : index
    %c0_20 = arith.constant 0 : index
    %29 = vector.load %arg9[%c0_19, %c0_20] : memref<1x512xf32, #tpu.memory_space<vmem>>, vector<1x512xf32>
    %30 = vector.broadcast %29 : vector<1x512xf32> to vector<16x512xf32>
    %31 = arith.mulf %28, %30 : vector<16x512xf32>
    %c0_21 = arith.constant 0 : index
    %c0_22 = arith.constant 0 : index
    %32 = vector.load %arg10[%c0_21, %c0_22] : memref<1x512xf32, #tpu.memory_space<vmem>>, vector<1x512xf32>
    %33 = vector.broadcast %32 : vector<1x512xf32> to vector<16x512xf32>
    %34 = arith.addf %31, %33 : vector<16x512xf32>
    %cst_23 = arith.constant 0.000000e+00 : f32
    %35 = vector.broadcast %cst_23 : f32 to vector<16x512xf32>
    %36 = arith.maximumf %34, %35 : vector<16x512xf32>
    %37 = arith.truncf %36 : vector<16x512xf32> to vector<16x512xbf16>
    %c0_24 = arith.constant 0 : index
    %c0_25 = arith.constant 0 : index
    %38 = vector.load %arg11[%c0_24, %c0_25] : memref<512x256xi8, #tpu.memory_space<vmem>>, vector<512x256xi8>
    %39 = arith.sitofp %38 : vector<512x256xi8> to vector<512x256xbf16>
    %cst_26 = arith.constant dense<0.000000e+00> : vector<16x256xf32>
    %40 = tpu.matmul %37, %39, %cst_26 {dimension_numbers = #tpu.dot_dimension_numbers<[1], [0], [0], [1], [0, 0, 1, 1], [], []>} : vector<16x512xbf16>, vector<512x256xbf16>, vector<16x256xf32> -> vector<16x256xf32>
    %c0_27 = arith.constant 0 : index
    %c0_28 = arith.constant 0 : index
    %41 = vector.load %arg12[%c0_27, %c0_28] : memref<1x256xf32, #tpu.memory_space<vmem>>, vector<1x256xf32>
    %42 = vector.broadcast %41 : vector<1x256xf32> to vector<16x256xf32>
    %43 = arith.mulf %40, %42 : vector<16x256xf32>
    %c0_29 = arith.constant 0 : index
    %c0_30 = arith.constant 0 : index
    %44 = vector.load %arg13[%c0_29, %c0_30] : memref<1x256xf32, #tpu.memory_space<vmem>>, vector<1x256xf32>
    %45 = vector.broadcast %44 : vector<1x256xf32> to vector<16x256xf32>
    %46 = arith.addf %43, %45 : vector<16x256xf32>
    %cst_31 = arith.constant 0.000000e+00 : f32
    %47 = vector.broadcast %cst_31 : f32 to vector<16x256xf32>
    %48 = arith.maximumf %46, %47 : vector<16x256xf32>
    %49 = arith.truncf %48 : vector<16x256xf32> to vector<16x256xbf16>
    %c0_32 = arith.constant 0 : index
    %c0_33 = arith.constant 0 : index
    %50 = vector.load %arg14[%c0_32, %c0_33] : memref<256x128xi8, #tpu.memory_space<vmem>>, vector<256x128xi8>
    %51 = arith.sitofp %50 : vector<256x128xi8> to vector<256x128xbf16>
    %cst_34 = arith.constant dense<0.000000e+00> : vector<16x128xf32>
    %52 = tpu.matmul %49, %51, %cst_34 {dimension_numbers = #tpu.dot_dimension_numbers<[1], [0], [0], [1], [0, 0, 1, 1], [], []>} : vector<16x256xbf16>, vector<256x128xbf16>, vector<16x128xf32> -> vector<16x128xf32>
    %c0_35 = arith.constant 0 : index
    %c0_36 = arith.constant 0 : index
    %53 = vector.load %arg15[%c0_35, %c0_36] : memref<1x128xf32, #tpu.memory_space<vmem>>, vector<1x128xf32>
    %54 = vector.broadcast %53 : vector<1x128xf32> to vector<16x128xf32>
    %55 = arith.mulf %52, %54 : vector<16x128xf32>
    %c0_37 = arith.constant 0 : index
    %c0_38 = arith.constant 0 : index
    %56 = vector.load %arg16[%c0_37, %c0_38] : memref<1x128xf32, #tpu.memory_space<vmem>>, vector<1x128xf32>
    %57 = vector.broadcast %56 : vector<1x128xf32> to vector<16x128xf32>
    %58 = arith.addf %55, %57 : vector<16x128xf32>
    %59 = tpu.iota {dimensions = array<i32: 1>} : vector<16x128xi32>
    %c16_i32 = arith.constant 16 : i32
    %60 = vector.broadcast %c16_i32 : i32 to vector<16x128xi32>
    %61 = arith.cmpi slt, %59, %60 : vector<16x128xi32>
    %c16_i32_39 = arith.constant 16 : i32
    %62 = vector.broadcast %c16_i32_39 : i32 to vector<16x128xi32>
    %63 = arith.cmpi eq, %59, %62 : vector<16x128xi32>
    %c16_i32_40 = arith.constant 16 : i32
    %64 = vector.broadcast %c16_i32_40 : i32 to vector<16x128xi32>
    %65 = arith.cmpi sgt, %59, %64 : vector<16x128xi32>
    %c33_i32 = arith.constant 33 : i32
    %66 = vector.broadcast %c33_i32 : i32 to vector<16x128xi32>
    %67 = arith.cmpi slt, %59, %66 : vector<16x128xi32>
    %68 = arith.andi %65, %67 : vector<16x128xi1>
    %cst_41 = arith.constant -1.000000e+30 : f32
    %69 = vector.broadcast %cst_41 : f32 to vector<16x128xf32>
    %70 = arith.select %61, %58, %69 : vector<16x128xi1>, vector<16x128xf32>
    %cst_42 = arith.constant dense<0xFF800000> : vector<16xf32>
    %71 = vector.multi_reduction <maximumf>, %70, %cst_42 [1] : vector<16x128xf32> to vector<16xf32>
    %72 = vector.shape_cast %71 : vector<16xf32> to vector<16x1xf32>
    %73 = vector.broadcast %72 : vector<16x1xf32> to vector<16x128xf32>
    %74 = arith.subf %70, %73 : vector<16x128xf32>
    %75 = math.exp %74 : vector<16x128xf32>
    %cst_43 = arith.constant dense<0.000000e+00> : vector<16xf32>
    %76 = vector.multi_reduction <add>, %75, %cst_43 [1] : vector<16x128xf32> to vector<16xf32>
    %77 = vector.shape_cast %76 : vector<16xf32> to vector<16x1xf32>
    %cst_44 = arith.constant 1.000000e+00 : f32
    %78 = vector.broadcast %cst_44 : f32 to vector<16x1xf32>
    %79 = arith.divf %78, %77 : vector<16x1xf32>
    %80 = math.log %77 : vector<16x1xf32>
    %81 = arith.addf %72, %80 : vector<16x1xf32>
    %82 = vector.broadcast %79 : vector<16x1xf32> to vector<16x128xf32>
    %83 = arith.mulf %75, %82 : vector<16x128xf32>
    %cst_45 = arith.constant 0.000000e+00 : f32
    %84 = vector.broadcast %cst_45 : f32 to vector<16x128xf32>
    %85 = arith.select %61, %83, %84 : vector<16x128xi1>, vector<16x128xf32>
    %86 = arith.select %63, %58, %85 : vector<16x128xi1>, vector<16x128xf32>
    %87 = vector.broadcast %81 : vector<16x1xf32> to vector<16x128xf32>
    %88 = arith.subf %58, %87 : vector<16x128xf32>
    %89 = arith.select %68, %88, %86 : vector<16x128xi1>, vector<16x128xf32>
    %c0_46 = arith.constant 0 : index
    %c0_47 = arith.constant 0 : index
    %90 = vector.load %arg17[%c0_46, %c0_47] : memref<16x128xf32, #tpu.memory_space<vmem>>, vector<16x128xf32>
    tpu.vector_store %arg17[%c0_46, %c0_47], %89 {strides = array<i32>} : memref<16x128xf32, #tpu.memory_space<vmem>>, vector<16x128xf32>,
    return
  }
  func.func @transform_0(%arg0: i32) -> (i32, i32) {
    %c0_i32 = arith.constant 0 : i32
    %c0_i32_0 = arith.constant 0 : i32
    return %arg0, %c0_i32 : i32, i32
  }
  func.func @transform_1(%arg0: i32) -> (i32, i32) {
    %c0_i32 = arith.constant 0 : i32
    %c0_i32_0 = arith.constant 0 : i32
    %c0_i32_1 = arith.constant 0 : i32
    return %c0_i32, %c0_i32_0 : i32, i32
  }
  func.func @transform_2(%arg0: i32) -> (i32, i32) {
    %c0_i32 = arith.constant 0 : i32
    %c0_i32_0 = arith.constant 0 : i32
    %c0_i32_1 = arith.constant 0 : i32
    return %c0_i32, %c0_i32_0 : i32, i32
  }
  func.func @transform_3(%arg0: i32) -> (i32, i32) {
    %c0_i32 = arith.constant 0 : i32
    %c0_i32_0 = arith.constant 0 : i32
    %c0_i32_1 = arith.constant 0 : i32
    return %c0_i32, %c0_i32_0 : i32, i32
  }
  func.func @transform_4(%arg0: i32) -> (i32, i32) {
    %c0_i32 = arith.constant 0 : i32
    %c0_i32_0 = arith.constant 0 : i32
    %c0_i32_1 = arith.constant 0 : i32
    return %c0_i32, %c0_i32_0 : i32, i32
  }
  func.func @transform_5(%arg0: i32) -> (i32, i32) {
    %c0_i32 = arith.constant 0 : i32
    %c0_i32_0 = arith.constant 0 : i32
    %c0_i32_1 = arith.constant 0 : i32
    return %c0_i32, %c0_i32_0 : i32, i32
  }
  func.func @transform_6(%arg0: i32) -> (i32, i32) {
    %c0_i32 = arith.constant 0 : i32
    %c0_i32_0 = arith.constant 0 : i32
    %c0_i32_1 = arith.constant 0 : i32
    return %c0_i32, %c0_i32_0 : i32, i32
  }
  func.func @transform_7(%arg0: i32) -> (i32, i32) {
    %c0_i32 = arith.constant 0 : i32
    %c0_i32_0 = arith.constant 0 : i32
    %c0_i32_1 = arith.constant 0 : i32
    return %c0_i32, %c0_i32_0 : i32, i32
  }
  func.func @transform_8(%arg0: i32) -> (i32, i32) {
    %c0_i32 = arith.constant 0 : i32
    %c0_i32_0 = arith.constant 0 : i32
    %c0_i32_1 = arith.constant 0 : i32
    return %c0_i32, %c0_i32_0 : i32, i32
  }
  func.func @transform_9(%arg0: i32) -> (i32, i32) {
    %c0_i32 = arith.constant 0 : i32
    %c0_i32_0 = arith.constant 0 : i32
    %c0_i32_1 = arith.constant 0 : i32
    return %c0_i32, %c0_i32_0 : i32, i32
  }
  func.func @transform_10(%arg0: i32) -> (i32, i32) {
    %c0_i32 = arith.constant 0 : i32
    %c0_i32_0 = arith.constant 0 : i32
    %c0_i32_1 = arith.constant 0 : i32
    return %c0_i32, %c0_i32_0 : i32, i32
  }
  func.func @transform_11(%arg0: i32) -> (i32, i32) {
    %c0_i32 = arith.constant 0 : i32
    %c0_i32_0 = arith.constant 0 : i32
    %c0_i32_1 = arith.constant 0 : i32
    return %c0_i32, %c0_i32_0 : i32, i32
  }
  func.func @transform_12(%arg0: i32) -> (i32, i32) {
    %c0_i32 = arith.constant 0 : i32
    %c0_i32_0 = arith.constant 0 : i32
    %c0_i32_1 = arith.constant 0 : i32
    return %c0_i32, %c0_i32_0 : i32, i32
  }
  func.func @transform_13(%arg0: i32) -> (i32, i32) {
    %c0_i32 = arith.constant 0 : i32
    %c0_i32_0 = arith.constant 0 : i32
    %c0_i32_1 = arith.constant 0 : i32
    return %c0_i32, %c0_i32_0 : i32, i32
  }
  func.func @transform_14(%arg0: i32) -> (i32, i32) {
    %c0_i32 = arith.constant 0 : i32
    %c0_i32_0 = arith.constant 0 : i32
    %c0_i32_1 = arith.constant 0 : i32
    return %c0_i32, %c0_i32_0 : i32, i32
  }
  func.func @transform_15(%arg0: i32) -> (i32, i32) {
    %c0_i32 = arith.constant 0 : i32
    %c0_i32_0 = arith.constant 0 : i32
    %c0_i32_1 = arith.constant 0 : i32
    return %c0_i32, %c0_i32_0 : i32, i32
  }
  func.func @transform_16(%arg0: i32) -> (i32, i32) {
    %c0_i32 = arith.constant 0 : i32
    %c0_i32_0 = arith.constant 0 : i32
    return %arg0, %c0_i32 : i32, i32
  }
}

</mosaic_0001>

<llo_original>
// kernel: actor_critic_forward.1
$region0: #{actor_critic_forward.1}
  #allocation0 [shape = 'u32[]', space=smem, size = 0x4, offset = 0x4, fixed_abs, tag = 'smem constant byte address 0x4 - core index']
  #allocation1 [shape = 'u32[144,128]{1,0:T(1,128)}', space=vmem, size = 0x12000, scoped, tag = 'internal scratch']
  %s0 = inlined_call_operand.vmem [shape: f32[16,32], index: 0, kind: input, shape index: {}]
  %s1 = inlined_call_operand.vmem [shape: s8[32,512], index: 1, kind: input, shape index: {}]
  %s2 = inlined_call_operand.vmem [shape: f32[1,512], index: 2, kind: input, shape index: {}]
  %s3 = inlined_call_operand.hbm [shape: f32[1,512], index: 3, kind: input, shape index: {}]
  %s4 = inlined_call_operand.hbm [shape: s8[512,1024], index: 4, kind: input, shape index: {}]
  %s5 = inlined_call_operand.vmem [shape: f32[1,1024], index: 5, kind: input, shape index: {}]
  %s6 = inlined_call_operand.hbm [shape: f32[1,1024], index: 6, kind: input, shape index: {}]
  %s7 = inlined_call_operand.hbm [shape: s8[1024,512], index: 7, kind: input, shape index: {}]
  %s8 = inlined_call_operand.hbm [shape: f32[1,512], index: 8, kind: input, shape index: {}]
  %s9 = inlined_call_operand.hbm [shape: f32[1,512], index: 9, kind: input, shape index: {}]
  %s10 = inlined_call_operand.hbm [shape: s8[512,256], index: 10, kind: input, shape index: {}]
  %s11 = inlined_call_operand.hbm [shape: f32[1,256], index: 11, kind: input, shape index: {}]
  %s12 = inlined_call_operand.hbm [shape: f32[1,256], index: 12, kind: input, shape index: {}]
  %s13 = inlined_call_operand.hbm [shape: s8[256,128], index: 13, kind: input, shape index: {}]
  %s14 = inlined_call_operand.vmem [shape: f32[1,128], index: 14, kind: input, shape index: {}]
  %s15 = inlined_call_operand.hbm [shape: f32[1,128], index: 15, kind: input, shape index: {}]
  %s16 = inlined_call_operand.vmem [shape: f32[16,128], index: 16, kind: output, shape index: {}]
  %s17 = sld [smem:[#allocation0]]
  $region118: #{actor_critic_forward.1} parent=0
    _
  %s19 = ssub.s32 1, %s17
  %s20 = scalar_select 0, %s19, %s17
  $region1: #{actor_critic_forward.1} parent=0
    #allocation2 [shape = 'u8[2048]{0}', space=vmem, size = 0x800, scoped, tag = 'input window, operand 3, single buffered']
    #allocation3 [shape = 's32[1]{0}', space=sflag, size = 0x4, scoped, tag = 'scoped memory for actor_critic_forward.1']
    #allocation4 [shape = 'u8[524288]{0}', space=vmem, size = 0x80000, scoped, tag = 'input window, operand 4, single buffered']
    #allocation5 [shape = 's32[1]{0}', space=sflag, size = 0x4, scoped, tag = 'scoped memory for actor_critic_forward.1']
    #allocation6 [shape = 'u8[4096]{0}', space=vmem, size = 0x1000, scoped, tag = 'input window, operand 6, single buffered']
    #allocation7 [shape = 'u8[524288]{0}', space=vmem, size = 0x80000, scoped, tag = 'input window, operand 7, single buffered']
    #allocation8 [shape = 's32[1]{0}', space=sflag, size = 0x4, scoped, tag = 'scoped memory for actor_critic_forward.1']
    #allocation9 [shape = 'u8[2048]{0}', space=vmem, size = 0x800, scoped, tag = 'input window, operand 8, single buffered']
    #allocation10 [shape = 'u8[2048]{0}', space=vmem, size = 0x800, scoped, tag = 'input window, operand 9, single buffered']
    #allocation11 [shape = 's32[1]{0}', space=sflag, size = 0x4, scoped, tag = 'scoped memory for actor_critic_forward.1']
    #allocation12 [shape = 'u8[131072]{0}', space=vmem, size = 0x20000, scoped, tag = 'input window, operand 10, single buffered']
    #allocation13 [shape = 'u8[1024]{0}', space=vmem, size = 0x400, scoped, tag = 'input window, operand 11, single buffered']
    #allocation14 [shape = 's32[1]{0}', space=sflag, size = 0x4, scoped, tag = 'scoped memory for actor_critic_forward.1']
    #allocation15 [shape = 'u8[1024]{0}', space=vmem, size = 0x400, scoped, tag = 'input window, operand 12, single buffered']
    #allocation16 [shape = 'u8[32768]{0}', space=vmem, size = 0x8000, scoped, tag = 'input window, operand 13, single buffered']
    #allocation17 [shape = 's32[1]{0}', space=sflag, size = 0x4, scoped, tag = 'scoped memory for actor_critic_forward.1']
    #allocation18 [shape = 'u8[512]{0}', space=vmem, size = 0x400, scoped, tag = 'input window, operand 15, single buffered']
    %21 = vsyncpa [#allocation3], 0
    %22 = vsyncpa [#allocation5], 0
    %23 = vsyncpa [#allocation8], 0
    %24 = vsyncpa [#allocation11], 0
    %25 = vsyncpa [#allocation14], 0
    %26 = vsyncpa [#allocation17], 0
    // Predicated region
    $region2: #{actor_critic_forward.1} parent=1 // pred_check
      _
    $region3: #{actor_critic_forward.1} parent=1 // pred_check_branch
      %28 = sbr.rel (0) target = $region5
    $region4: #{actor_critic_forward.1} parent=1 // pred_region
      _
    $region5: #{actor_critic_forward.1} parent=1 // pred_fallthru
      _
    // Predicated region
    $region6: #{actor_critic_forward.1} parent=1 // pred_check
      _
    $region7: #{actor_critic_forward.1} parent=1 // pred_check_branch
      %30 = sbr.rel (0) target = $region9
    $region8: #{actor_critic_forward.1} parent=1 // pred_region
      _
    $region9: #{actor_critic_forward.1} parent=1 // pred_fallthru
      _
    // Predicated region
    $region10: #{actor_critic_forward.1} parent=1 // pred_check
      _
    $region11: #{actor_critic_forward.1} parent=1 // pred_check_branch
      %32 = sbr.rel (0) target = $region13
    $region12: #{actor_critic_forward.1} parent=1 // pred_region
      _
    $region13: #{actor_critic_forward.1} parent=1 // pred_fallthru
      _
    // Predicated region
    $region14: #{actor_critic_forward.1} parent=1 // pred_check
      _
    $region15: #{actor_critic_forward.1} parent=1 // pred_check_branch
      %34 = sbr.rel (0) target = $region17
    $region16: #{actor_critic_forward.1} parent=1 // pred_region
      %s36 = ssub.s32 64, 64
      %37 = vsyncadd [#allocation3], %s36
      %s39 = sshll.u32 [#allocation2], 4
      %s40 = int_to_ptr.vmem [resolvable:$true] %s39
      %42 = dma.hbm_to_vmem [thread:$0]  %s3, 64, %s40, [#allocation3]
    $region17: #{actor_critic_forward.1} parent=1 // pred_fallthru
      _
    // Predicated region
    $region18: #{actor_critic_forward.1} parent=1 // pred_check
      _
    $region19: #{actor_critic_forward.1} parent=1 // pred_check_branch
      %44 = sbr.rel (0) target = $region21
    $region20: #{actor_critic_forward.1} parent=1 // pred_region
      %s46 = ssub.s32 16384, 16384
      %47 = vsyncadd [#allocation5], %s46
      %s48 = sshll.u32 [#allocation4], 4
      %s49 = int_to_ptr.vmem [resolvable:$true] %s48
      %54 = dma.hbm_to_vmem [thread:$0]  %s4, 16384, %s49, [#allocation5], 1024, 1024, 64
    $region21: #{actor_critic_forward.1} parent=1 // pred_fallthru
      _
    // Predicated region
    $region22: #{actor_critic_forward.1} parent=1 // pred_check
      _
    $region23: #{actor_critic_forward.1} parent=1 // pred_check_branch
      %56 = sbr.rel (0) target = $region25
    $region24: #{actor_critic_forward.1} parent=1 // pred_region
      _
    $region25: #{actor_critic_forward.1} parent=1 // pred_fallthru
      _
    // Predicated region
    $region26: #{actor_critic_forward.1} parent=1 // pred_check
      _
    $region27: #{actor_critic_forward.1} parent=1 // pred_check_branch
      %58 = sbr.rel (0) target = $region29
    $region28: #{actor_critic_forward.1} parent=1 // pred_region
      %s60 = ssub.s32 128, 128
      %61 = vsyncadd [#allocation5], %s60
      %s63 = sshll.u32 [#allocation6], 4
      %s64 = int_to_ptr.vmem [resolvable:$true] %s63
      %66 = dma.hbm_to_vmem [thread:$0]  %s6, 128, %s64, [#allocation5]
    $region29: #{actor_critic_forward.1} parent=1 // pred_fallthru
      _
    // Predicated region
    $region30: #{actor_critic_forward.1} parent=1 // pred_check
      _
    $region31: #{actor_critic_forward.1} parent=1 // pred_check_branch
      %68 = sbr.rel (0) target = $region33
    $region32: #{actor_critic_forward.1} parent=1 // pred_region
      %s70 = ssub.s32 16384, 16384
      %71 = vsyncadd [#allocation8], %s70
      %s72 = sshll.u32 [#allocation7], 4
      %s73 = int_to_ptr.vmem [resolvable:$true] %s72
      %78 = dma.hbm_to_vmem [thread:$0]  %s7, 16384, %s73, [#allocation8], 512, 512, 32
    $region33: #{actor_critic_forward.1} parent=1 // pred_fallthru
      _
    // Predicated region
    $region34: #{actor_critic_forward.1} parent=1 // pred_check
      _
    $region35: #{actor_critic_forward.1} parent=1 // pred_check_branch
      %80 = sbr.rel (0) target = $region37
    $region36: #{actor_critic_forward.1} parent=1 // pred_region
      %s82 = ssub.s32 64, 64
      %83 = vsyncadd [#allocation8], %s82
      %s85 = sshll.u32 [#allocation9], 4
      %s86 = int_to_ptr.vmem [resolvable:$true] %s85
      %88 = dma.hbm_to_vmem [thread:$0]  %s8, 64, %s86, [#allocation8]
    $region37: #{actor_critic_forward.1} parent=1 // pred_fallthru
      _
    // Predicated region
    $region38: #{actor_critic_forward.1} parent=1 // pred_check
      _
    $region39: #{actor_critic_forward.1} parent=1 // pred_check_branch
      %90 = sbr.rel (0) target = $region41
    $region40: #{actor_critic_forward.1} parent=1 // pred_region
      %s92 = ssub.s32 64, 64
      %93 = vsyncadd [#allocation11], %s92
      %s95 = sshll.u32 [#allocation10], 4
      %s96 = int_to_ptr.vmem [resolvable:$true] %s95
      %98 = dma.hbm_to_vmem [thread:$0]  %s9, 64, %s96, [#allocation11]
    $region41: #{actor_critic_forward.1} parent=1 // pred_fallthru
      _
    // Predicated region
    $region42: #{actor_critic_forward.1} parent=1 // pred_check
      _
    $region43: #{actor_critic_forward.1} parent=1 // pred_check_branch
      %100 = sbr.rel (0) target = $region45
    $region44: #{actor_critic_forward.1} parent=1 // pred_region
      %s102 = ssub.s32 4096, 4096
      %103 = vsyncadd [#allocation11], %s102
      %s104 = sshll.u32 [#allocation12], 4
      %s105 = int_to_ptr.vmem [resolvable:$true] %s104
      %110 = dma.hbm_to_vmem [thread:$0]  %s10, 4096, %s105, [#allocation11], 256, 256, 16
    $region45: #{actor_critic_forward.1} parent=1 // pred_fallthru
      _
    // Predicated region
    $region46: #{actor_critic_forward.1} parent=1 // pred_check
      _
    $region47: #{actor_critic_forward.1} parent=1 // pred_check_branch
      %112 = sbr.rel (0) target = $region49
    $region48: #{actor_critic_forward.1} parent=1 // pred_region
      %s114 = ssub.s32 32, 32
      %115 = vsyncadd [#allocation14], %s114
      %s117 = sshll.u32 [#allocation13], 4
      %s118 = int_to_ptr.vmem [resolvable:$true] %s117
      %120 = dma.hbm_to_vmem [thread:$0]  %s11, 32, %s118, [#allocation14]
    $region49: #{actor_critic_forward.1} parent=1 // pred_fallthru
      _
    // Predicated region
    $region50: #{actor_critic_forward.1} parent=1 // pred_check
      _
    $region51: #{actor_critic_forward.1} parent=1 // pred_check_branch
      %122 = sbr.rel (0) target = $region53
    $region52: #{actor_critic_forward.1} parent=1 // pred_region
      %s124 = ssub.s32 32, 32
      %125 = vsyncadd [#allocation14], %s124
      %s127 = sshll.u32 [#allocation15], 4
      %s128 = int_to_ptr.vmem [resolvable:$true] %s127
      %130 = dma.hbm_to_vmem [thread:$0]  %s12, 32, %s128, [#allocation14]
    $region53: #{actor_critic_forward.1} parent=1 // pred_fallthru
      _
    // Predicated region
    $region54: #{actor_critic_forward.1} parent=1 // pred_check
      _
    $region55: #{actor_critic_forward.1} parent=1 // pred_check_branch
      %132 = sbr.rel (0) target = $region57
    $region56: #{actor_critic_forward.1} parent=1 // pred_region
      %s134 = ssub.s32 1024, 1024
      %135 = vsyncadd [#allocation17], %s134
      %s136 = sshll.u32 [#allocation16], 4
      %s137 = int_to_ptr.vmem [resolvable:$true] %s136
      %142 = dma.hbm_to_vmem [thread:$0]  %s13, 1024, %s137, [#allocation17], 128, 128, 8
    $region57: #{actor_critic_forward.1} parent=1 // pred_fallthru
      _
    // Predicated region
    $region58: #{actor_critic_forward.1} parent=1 // pred_check
      _
    $region59: #{actor_critic_forward.1} parent=1 // pred_check_branch
      %144 = sbr.rel (0) target = $region61
    $region60: #{actor_critic_forward.1} parent=1 // pred_region
      _
    $region61: #{actor_critic_forward.1} parent=1 // pred_fallthru
      _
    // Predicated region
    $region62: #{actor_critic_forward.1} parent=1 // pred_check
      _
    $region63: #{actor_critic_forward.1} parent=1 // pred_check_branch
      %146 = sbr.rel (0) target = $region65
    $region64: #{actor_critic_forward.1} parent=1 // pred_region
      %s148 = ssub.s32 16, 16
      %149 = vsyncadd [#allocation17], %s148
      %s151 = sshll.u32 [#allocation18], 4
      %s152 = int_to_ptr.vmem [resolvable:$true] %s151
      %154 = dma.hbm_to_vmem [thread:$0]  %s15, 16, %s152, [#allocation17]
    $region65: #{actor_critic_forward.1} parent=1 // pred_fallthru
      _
    // Predicated region
    $region66: #{actor_critic_forward.1} parent=1 // pred_check
      _
    $region67: #{actor_critic_forward.1} parent=1 // pred_check_branch
      %156 = sbr.rel (0) target = $region69
    $region68: #{actor_critic_forward.1} parent=1 // pred_region
      %157 = dma.done [#allocation3], 64
    $region69: #{actor_critic_forward.1} parent=1 // pred_fallthru
      _
    // Predicated region
    $region70: #{actor_critic_forward.1} parent=1 // pred_check
      _
    $region71: #{actor_critic_forward.1} parent=1 // pred_check_branch
      %159 = sbr.rel (0) target = $region73
    $region72: #{actor_critic_forward.1} parent=1 // pred_region
      %160 = dma.done [#allocation5], 16384
    $region73: #{actor_critic_forward.1} parent=1 // pred_fallthru
      _
    // Predicated region
    $region74: #{actor_critic_forward.1} parent=1 // pred_check
      _
    $region75: #{actor_critic_forward.1} parent=1 // pred_check_branch
      %162 = sbr.rel (0) target = $region77
    $region76: #{actor_critic_forward.1} parent=1 // pred_region
      %163 = dma.done [#allocation5], 128
    $region77: #{actor_critic_forward.1} parent=1 // pred_fallthru
      _
    // Predicated region
    $region78: #{actor_critic_forward.1} parent=1 // pred_check
      _
    $region79: #{actor_critic_forward.1} parent=1 // pred_check_branch
      %165 = sbr.rel (0) target = $region81
    $region80: #{actor_critic_forward.1} parent=1 // pred_region
      %166 = dma.done [#allocation8], 16384
    $region81: #{actor_critic_forward.1} parent=1 // pred_fallthru
      _
    // Predicated region
    $region82: #{actor_critic_forward.1} parent=1 // pred_check
      _
    $region83: #{actor_critic_forward.1} parent=1 // pred_check_branch
      %168 = sbr.rel (0) target = $region85
    $region84: #{actor_critic_forward.1} parent=1 // pred_region
      %169 = dma.done [#allocation8], 64
    $region85: #{actor_critic_forward.1} parent=1 // pred_fallthru
      _
    // Predicated region
    $region86: #{actor_critic_forward.1} parent=1 // pred_check
      _
    $region87: #{actor_critic_forward.1} parent=1 // pred_check_branch
      %171 = sbr.rel (0) target = $region89
    $region88: #{actor_critic_forward.1} parent=1 // pred_region
      %172 = dma.done [#allocation11], 64
    $region89: #{actor_critic_forward.1} parent=1 // pred_fallthru
      _
    // Predicated region
    $region90: #{actor_critic_forward.1} parent=1 // pred_check
      _
    $region91: #{actor_critic_forward.1} parent=1 // pred_check_branch
      %174 = sbr.rel (0) target = $region93
    $region92: #{actor_critic_forward.1} parent=1 // pred_region
      %175 = dma.done [#allocation11], 4096
    $region93: #{actor_critic_forward.1} parent=1 // pred_fallthru
      _
    // Predicated region
    $region94: #{actor_critic_forward.1} parent=1 // pred_check
      _
    $region95: #{actor_critic_forward.1} parent=1 // pred_check_branch
      %177 = sbr.rel (0) target = $region97
    $region96: #{actor_critic_forward.1} parent=1 // pred_region
      %178 = dma.done [#allocation14], 32
    $region97: #{actor_critic_forward.1} parent=1 // pred_fallthru
      _
    // Predicated region
    $region98: #{actor_critic_forward.1} parent=1 // pred_check
      _
    $region99: #{actor_critic_forward.1} parent=1 // pred_check_branch
      %180 = sbr.rel (0) target = $region101
    $region100: #{actor_critic_forward.1} parent=1 // pred_region
      %181 = dma.done [#allocation14], 32
    $region101: #{actor_critic_forward.1} parent=1 // pred_fallthru
      _
    // Predicated region
    $region102: #{actor_critic_forward.1} parent=1 // pred_check
      _
    $region103: #{actor_critic_forward.1} parent=1 // pred_check_branch
      %183 = sbr.rel (0) target = $region105
    $region104: #{actor_critic_forward.1} parent=1 // pred_region
      %184 = dma.done [#allocation17], 1024
    $region105: #{actor_critic_forward.1} parent=1 // pred_fallthru
      _
    // Predicated region
    $region106: #{actor_critic_forward.1} parent=1 // pred_check
      _
    $region107: #{actor_critic_forward.1} parent=1 // pred_check_branch
      %186 = sbr.rel (0) target = $region109
    $region108: #{actor_critic_forward.1} parent=1 // pred_region
      %187 = dma.done [#allocation17], 16
    $region109: #{actor_critic_forward.1} parent=1 // pred_fallthru
      _
    %v189 = vld [vmem:[%s0] sm:$0xff]
    %v190 = vld [vmem:[%s0 + $0x8] sm:$0xff]
    %v191 = vpack.c.bf16 %v190, %v189
    %v192 = vld [vmem:[%s1] sm:$0xff]
    %v193 = vld [vmem:[%s1 + $0x8] sm:$0xff]
    %v194 = vld [vmem:[%s1 + $0x10] sm:$0xff]
    %v195 = vld [vmem:[%s1 + $0x18] sm:$0xff]
    %v196 = vunpack.c.l.s8.bf16 %v192
    %v197 = vunpack.c.l.s8.bf16 %v193
    %v198 = vunpack.c.l.s8.bf16 %v194
    %v199 = vunpack.c.l.s8.bf16 %v195
    %v200 = vunpack.c.h.s8.bf16 %v192
    %v201 = vunpack.c.h.s8.bf16 %v193
    %v202 = vunpack.c.h.s8.bf16 %v194
    %v203 = vunpack.c.h.s8.bf16 %v195
    %vm204 = vcmask 261120
    %v206 = vsel %vm204, %v191, 0
    %208 = vmatprep.subr.bf16.mxu0 0
    %209 = vmatpush1.bf16.msra.mxu0 0
    %210 = vmatprep.subr.bf16.mxu0 0
    %211 = vmatpush1.bf16.msra.mxu0 0
    %212 = vmatprep.subr.bf16.mxu0 0
    %213 = vmatpush1.bf16.msra.mxu0 0
    %214 = vmatprep.subr.bf16.mxu0 0
    %215 = vmatpush1.bf16.msra.mxu0 0
    %216 = vmatprep.subr.bf16.mxu0 0
    %217 = vmatpush1.bf16.msra.mxu0 0
    %218 = vmatprep.subr.bf16.mxu0 0
    %219 = vmatpush1.bf16.msra.mxu0 0
    %220 = vmatprep.subr.bf16.mxu0 %v201
    %221 = vmatpush1.bf16.msra.mxu0 %v200
    %222 = vmatprep.subr.bf16.mxu0 %v197
    %223 = vmatpush1.bf16.msra.mxu0 %v196
    %224 = vmatprep.subr.bf16.mxu0 0
    %225 = vmatpush2.bf16.msra.mxu0 0
    %226 = vmatprep.subr.bf16.mxu0 0
    %227 = vmatpush2.bf16.msra.mxu0 0
    %228 = vmatprep.subr.bf16.mxu0 0
    %229 = vmatpush2.bf16.msra.mxu0 0
    %230 = vmatprep.subr.bf16.mxu0 0
    %231 = vmatpush2.bf16.msra.mxu0 0
    %232 = vmatprep.subr.bf16.mxu0 0
    %233 = vmatpush2.bf16.msra.mxu0 0
    %234 = vmatprep.subr.bf16.mxu0 0
    %235 = vmatpush2.bf16.msra.mxu0 0
    %236 = vmatprep.subr.bf16.mxu0 0
    %237 = vmatpush2.bf16.msra.mxu0 0
    %238 = vmatprep.subr.bf16.mxu0 0
    %239 = vmatpush2.bf16.msra.mxu0 0
    %240 = vmatprep.mubr.bf16.mxu0 0
    %241 = vmatmul.mubr.bf16.gmra.mxu0 %v206
    %v242 = vpop.f32.mrf.mxu0
    %v243 = vadd.f32 0.0, %v242
    %v244 = vpop.f32.mrf.mxu0
    %v245 = vadd.f32 0.0, %v244
    %v246 = vpop.f32.mrf.mxu0
    %v247 = vadd.f32 0.0, %v246
    %v248 = vpop.f32.mrf.mxu0
    %v249 = vadd.f32 0.0, %v248
    %250 = vdwg.mxu0
    %251 = vmatprep.subr.bf16.mxu0 0
    %252 = vmatpush1.bf16.msra.mxu0 0
    %253 = vmatprep.subr.bf16.mxu0 0
    %254 = vmatpush1.bf16.msra.mxu0 0
    %255 = vmatprep.subr.bf16.mxu0 0
    %256 = vmatpush1.bf16.msra.mxu0 0
    %257 = vmatprep.subr.bf16.mxu0 0
    %258 = vmatpush1.bf16.msra.mxu0 0
    %259 = vmatprep.subr.bf16.mxu0 0
    %260 = vmatpush1.bf16.msra.mxu0 0
    %261 = vmatprep.subr.bf16.mxu0 0
    %262 = vmatpush1.bf16.msra.mxu0 0
    %263 = vmatprep.subr.bf16.mxu0 %v203
    %264 = vmatpush1.bf16.msra.mxu0 %v202
    %265 = vmatprep.subr.bf16.mxu0 %v199
    %266 = vmatpush1.bf16.msra.mxu0 %v198
    %267 = vmatprep.subr.bf16.mxu0 0
    %268 = vmatpush2.bf16.msra.mxu0 0
    %269 = vmatprep.subr.bf16.mxu0 0
    %270 = vmatpush2.bf16.msra.mxu0 0
    %271 = vmatprep.subr.bf16.mxu0 0
    %272 = vmatpush2.bf16.msra.mxu0 0
    %273 = vmatprep.subr.bf16.mxu0 0
    %274 = vmatpush2.bf16.msra.mxu0 0
    %275 = vmatprep.subr.bf16.mxu0 0
    %276 = vmatpush2.bf16.msra.mxu0 0
    %277 = vmatprep.subr.bf16.mxu0 0
    %278 = vmatpush2.bf16.msra.mxu0 0
    %279 = vmatprep.subr.bf16.mxu0 0
    %280 = vmatpush2.bf16.msra.mxu0 0
    %281 = vmatprep.subr.bf16.mxu0 0
    %282 = vmatpush2.bf16.msra.mxu0 0
    %283 = vmatprep.mubr.bf16.mxu0 0
    %284 = vmatmul.mubr.bf16.gmra.mxu0 %v206
    %v285 = vpop.f32.mrf.mxu0
    %v286 = vadd.f32 0.0, %v285
    %v287 = vpop.f32.mrf.mxu0
    %v288 = vadd.f32 0.0, %v287
    %v289 = vpop.f32.mrf.mxu0
    %v290 = vadd.f32 0.0, %v289
    %v291 = vpop.f32.mrf.mxu0
    %v292 = vadd.f32 0.0, %v291
    %293 = vdwg.mxu0
    %v294 = vld [vmem:[%s2] sm:$0xf]
    %v296 = vlaneseq
    %v297 = vshrl.u32 %v296, 7
    %v298 = vsub.s32 0, %v297
    %v299 = vrot.slane %v294, %v298
    %v300 = vlaneseq
    %v301 = vshrl.u32 %v300, 7
    %v302 = vsub.s32 1, %v301
    %v303 = vrot.slane %v294, %v302
    %v304 = vlaneseq
    %v305 = vshrl.u32 %v304, 7
    %v306 = vsub.s32 2, %v305
    %v307 = vrot.slane %v294, %v306
    %v308 = vlaneseq
    %v309 = vshrl.u32 %v308, 7
    %v310 = vsub.s32 3, %v309
    %v311 = vrot.slane %v294, %v310
    %v316 = vmul.f32 %v243, %v299
    %v317 = vmul.f32 %v245, %v303
    %v318 = vmul.f32 %v286, %v307
    %v319 = vmul.f32 %v288, %v311
    %v320 = vmul.f32 %v247, %v299
    %v321 = vmul.f32 %v249, %v303
    %v322 = vmul.f32 %v290, %v307
    %v323 = vmul.f32 %v292, %v311
    %v324 = vld [vmem:[#allocation2] sm:$0xf]
    %v326 = vlaneseq
    %v327 = vshrl.u32 %v326, 7
    %v328 = vsub.s32 0, %v327
    %v329 = vrot.slane %v324, %v328
    %v330 = vlaneseq
    %v331 = vshrl.u32 %v330, 7
    %v332 = vsub.s32 1, %v331
    %v333 = vrot.slane %v324, %v332
    %v334 = vlaneseq
    %v335 = vshrl.u32 %v334, 7
    %v336 = vsub.s32 2, %v335
    %v337 = vrot.slane %v324, %v336
    %v338 = vlaneseq
    %v339 = vshrl.u32 %v338, 7
    %v340 = vsub.s32 3, %v339
    %v341 = vrot.slane %v324, %v340
    %v346 = vadd.f32 %v316, %v329
    %v347 = vadd.f32 %v317, %v333
    %v348 = vadd.f32 %v318, %v337
    %v349 = vadd.f32 %v319, %v341
    %v350 = vadd.f32 %v320, %v329
    %v351 = vadd.f32 %v321, %v333
    %v352 = vadd.f32 %v322, %v337
    %v353 = vadd.f32 %v323, %v341
    %v354 = vmax.f32 %v346, 0.0
    %v355 = vmax.f32 %v347, 0.0
    %v356 = vmax.f32 %v348, 0.0
    %v357 = vmax.f32 %v349, 0.0
    %v358 = vmax.f32 %v350, 0.0
    %v359 = vmax.f32 %v351, 0.0
    %v360 = vmax.f32 %v352, 0.0
    %v361 = vmax.f32 %v353, 0.0
    %v362 = vpack.c.bf16 %v358, %v354
    %v363 = vpack.c.bf16 %v359, %v355
    %v364 = vpack.c.bf16 %v360, %v356
    %v365 = vpack.c.bf16 %v361, %v357
    %v366 = vld [vmem:[#allocation4] sm:$0xff]
    %v367 = vld [vmem:[#allocation4 + $0x8] sm:$0xff]
    %v368 = vld [vmem:[#allocation4 + $0x10] sm:$0xff]
    %v369 = vld [vmem:[#allocation4 + $0x18] sm:$0xff]
    %v370 = vld [vmem:[#allocation4 + $0x20] sm:$0xff]
    %v371 = vld [vmem:[#allocation4 + $0x28] sm:$0xff]
    %v372 = vld [vmem:[#allocation4 + $0x30] sm:$0xff]
    %v373 = vld [vmem:[#allocation4 + $0x38] sm:$0xff]
    %v374 = vld [vmem:[#allocation4 + $0x40] sm:$0xff]
    %v375 = vld [vmem:[#allocation4 + $0x48] sm:$0xff]
    %v376 = vld [vmem:[#allocation4 + $0x50] sm:$0xff]
    %v377 = vld [vmem:[#allocation4 + $0x58] sm:$0xff]
    %v378 = vld [vmem:[#allocation4 + $0x60] sm:$0xff]
    %v379 = vld [vmem:[#allocation4 + $0x68] sm:$0xff]
    %v380 = vld [vmem:[#allocation4 + $0x70] sm:$0xff]
    %v381 = vld [vmem:[#allocation4 + $0x78] sm:$0xff]
    %v382 = vld [vmem:[#allocation4 + $0x80] sm:$0xff]
    %v383 = vld [vmem:[#allocation4 + $0x88] sm:$0xff]
    %v384 = vld [vmem:[#allocation4 + $0x90] sm:$0xff]
    %v385 = vld [vmem:[#allocation4 + $0x98] sm:$0xff]
    %v386 = vld [vmem:[#allocation4 + $0xa0] sm:$0xff]
    %v387 = vld [vmem:[#allocation4 + $0xa8] sm:$0xff]
    %v388 = vld [vmem:[#allocation4 + $0xb0] sm:$0xff]
    %v389 = vld [vmem:[#allocation4 + $0xb8] sm:$0xff]
    %v390 = vld [vmem:[#allocation4 + $0xc0] sm:$0xff]
    %v391 = vld [vmem:[#allocation4 + $0xc8] sm:$0xff]
    %v392 = vld [vmem:[#allocation4 + $0xd0] sm:$0xff]
    %v393 = vld [vmem:[#allocation4 + $0xd8] sm:$0xff]
    %v394 = vld [vmem:[#allocation4 + $0xe0] sm:$0xff]
    %v395 = vld [vmem:[#allocation4 + $0xe8] sm:$0xff]
    %v396 = vld [vmem:[#allocation4 + $0xf0] sm:$0xff]
    %v397 = vld [vmem:[#allocation4 + $0xf8] sm:$0xff]
    %v398 = vld [vmem:[#allocation4 + $0x100] sm:$0xff]
    %v399 = vld [vmem:[#allocation4 + $0x108] sm:$0xff]
    %v400 = vld [vmem:[#allocation4 + $0x110] sm:$0xff]
    %v401 = vld [vmem:[#allocation4 + $0x118] sm:$0xff]
    %v402 = vld [vmem:[#allocation4 + $0x120] sm:$0xff]
    %v403 = vld [vmem:[#allocation4 + $0x128] sm:$0xff]
    %v404 = vld [vmem:[#allocation4 + $0x130] sm:$0xff]
    %v405 = vld [vmem:[#allocation4 + $0x138] sm:$0xff]
    %v406 = vld [vmem:[#allocation4 + $0x140] sm:$0xff]
    %v407 = vld [vmem:[#allocation4 + $0x148] sm:$0xff]
    %v408 = vld [vmem:[#allocation4 + $0x150] sm:$0xff]
    %v409 = vld [vmem:[#allocation4 + $0x158] sm:$0xff]
    %v410 = vld [vmem:[#allocation4 + $0x160] sm:$0xff]
    %v411 = vld [vmem:[#allocation4 + $0x168] sm:$0xff]
    %v412 = vld [vmem:[#allocation4 + $0x170] sm:$0xff]
    %v413 = vld [vmem:[#allocation4 + $0x178] sm:$0xff]
    %v414 = vld [vmem:[#allocation4 + $0x180] sm:$0xff]
    %v415 = vld [vmem:[#allocation4 + $0x188] sm:$0xff]
    %v416 = vld [vmem:[#allocation4 + $0x190] sm:$0xff]
    %v417 = vld [vmem:[#allocation4 + $0x198] sm:$0xff]
    %v418 = vld [vmem:[#allocation4 + $0x1a0] sm:$0xff]
    %v419 = vld [vmem:[#allocation4 + $0x1a8] sm:$0xff]
    %v420 = vld [vmem:[#allocation4 + $0x1b0] sm:$0xff]
    %v421 = vld [vmem:[#allocation4 + $0x1b8] sm:$0xff]
    %v422 = vld [vmem:[#allocation4 + $0x1c0] sm:$0xff]
    %v423 = vld [vmem:[#allocation4 + $0x1c8] sm:$0xff]
    %v424 = vld [vmem:[#allocation4 + $0x1d0] sm:$0xff]
    %v425 = vld [vmem:[#allocation4 + $0x1d8] sm:$0xff]
    %v426 = vld [vmem:[#allocation4 + $0x1e0] sm:$0xff]
    %v427 = vld [vmem:[#allocation4 + $0x1e8] sm:$0xff]
    %v428 = vld [vmem:[#allocation4 + $0x1f0] sm:$0xff]
    %v429 = vld [vmem:[#allocation4 + $0x1f8] sm:$0xff]
    %v430 = vld [vmem:[#allocation4 + $0x200] sm:$0xff]
    %v431 = vld [vmem:[#allocation4 + $0x208] sm:$0xff]
    %v432 = vld [vmem:[#allocation4 + $0x210] sm:$0xff]
    %v433 = vld [vmem:[#allocation4 + $0x218] sm:$0xff]
    %v434 = vld [vmem:[#allocation4 + $0x220] sm:$0xff]
    %v435 = vld [vmem:[#allocation4 + $0x228] sm:$0xff]
    %v436 = vld [vmem:[#allocation4 + $0x230] sm:$0xff]
    %v437 = vld [vmem:[#allocation4 + $0x238] sm:$0xff]
    %v438 = vld [vmem:[#allocation4 + $0x240] sm:$0xff]
    %v439 = vld [vmem:[#allocation4 + $0x248] sm:$0xff]
    %v440 = vld [vmem:[#allocation4 + $0x250] sm:$0xff]
    %v441 = vld [vmem:[#allocation4 + $0x258] sm:$0xff]
    %v442 = vld [vmem:[#allocation4 + $0x260] sm:$0xff]
    %v443 = vld [vmem:[#allocation4 + $0x268] sm:$0xff]
    %v444 = vld [vmem:[#allocation4 + $0x270] sm:$0xff]
    %v445 = vld [vmem:[#allocation4 + $0x278] sm:$0xff]
    %v446 = vld [vmem:[#allocation4 + $0x280] sm:$0xff]
    %v447 = vld [vmem:[#allocation4 + $0x288] sm:$0xff]
    %v448 = vld [vmem:[#allocation4 + $0x290] sm:$0xff]
    %v449 = vld [vmem:[#allocation4 + $0x298] sm:$0xff]
    %v450 = vld [vmem:[#allocation4 + $0x2a0] sm:$0xff]
    %v451 = vld [vmem:[#allocation4 + $0x2a8] sm:$0xff]
    %v452 = vld [vmem:[#allocation4 + $0x2b0] sm:$0xff]
    %v453 = vld [vmem:[#allocation4 + $0x2b8] sm:$0xff]
    %v454 = vld [vmem:[#allocation4 + $0x2c0] sm:$0xff]
    %v455 = vld [vmem:[#allocation4 + $0x2c8] sm:$0xff]
    %v456 = vld [vmem:[#allocation4 + $0x2d0] sm:$0xff]
    %v457 = vld [vmem:[#allocation4 + $0x2d8] sm:$0xff]
    %v458 = vld [vmem:[#allocation4 + $0x2e0] sm:$0xff]
    %v459 = vld [vmem:[#allocation4 + $0x2e8] sm:$0xff]
    %v460 = vld [vmem:[#allocation4 + $0x2f0] sm:$0xff]
    %v461 = vld [vmem:[#allocation4 + $0x2f8] sm:$0xff]
    %v462 = vld [vmem:[#allocation4 + $0x300] sm:$0xff]
    %v463 = vld [vmem:[#allocation4 + $0x308] sm:$0xff]
    %v464 = vld [vmem:[#allocation4 + $0x310] sm:$0xff]
    %v465 = vld [vmem:[#allocation4 + $0x318] sm:$0xff]
    %v466 = vld [vmem:[#allocation4 + $0x320] sm:$0xff]
    %v467 = vld [vmem:[#allocation4 + $0x328] sm:$0xff]
    %v468 = vld [vmem:[#allocation4 + $0x330] sm:$0xff]
    %v469 = vld [vmem:[#allocation4 + $0x338] sm:$0xff]
    %v470 = vld [vmem:[#allocation4 + $0x340] sm:$0xff]
    %v471 = vld [vmem:[#allocation4 + $0x348] sm:$0xff]
    %v472 = vld [vmem:[#allocation4 + $0x350] sm:$0xff]
    %v473 = vld [vmem:[#allocation4 + $0x358] sm:$0xff]
    %v474 = vld [vmem:[#allocation4 + $0x360] sm:$0xff]
    %v475 = vld [vmem:[#allocation4 + $0x368] sm:$0xff]
    %v476 = vld [vmem:[#allocation4 + $0x370] sm:$0xff]
    %v477 = vld [vmem:[#allocation4 + $0x378] sm:$0xff]
    %v478 = vld [vmem:[#allocation4 + $0x380] sm:$0xff]
    %v479 = vld [vmem:[#allocation4 + $0x388] sm:$0xff]
    %v480 = vld [vmem:[#allocation4 + $0x390] sm:$0xff]
    %v481 = vld [vmem:[#allocation4 + $0x398] sm:$0xff]
    %v482 = vld [vmem:[#allocation4 + $0x3a0] sm:$0xff]
    %v483 = vld [vmem:[#allocation4 + $0x3a8] sm:$0xff]
    %v484 = vld [vmem:[#allocation4 + $0x3b0] sm:$0xff]
    %v485 = vld [vmem:[#allocation4 + $0x3b8] sm:$0xff]
    %v486 = vld [vmem:[#allocation4 + $0x3c0] sm:$0xff]
    %v487 = vld [vmem:[#allocation4 + $0x3c8] sm:$0xff]
    %v488 = vld [vmem:[#allocation4 + $0x3d0] sm:$0xff]
    %v489 = vld [vmem:[#allocation4 + $0x3d8] sm:$0xff]
    %v490 = vld [vmem:[#allocation4 + $0x3e0] sm:$0xff]
    %v491 = vld [vmem:[#allocation4 + $0x3e8] sm:$0xff]
    %v492 = vld [vmem:[#allocation4 + $0x3f0] sm:$0xff]
    %v493 = vld [vmem:[#allocation4 + $0x3f8] sm:$0xff]
    %v494 = vunpack.c.l.s8.bf16 %v366
    %v495 = vunpack.c.l.s8.bf16 %v367
    %v496 = vunpack.c.l.s8.bf16 %v368
    %v497 = vunpack.c.l.s8.bf16 %v369
    %v498 = vunpack.c.l.s8.bf16 %v370
    %v499 = vunpack.c.l.s8.bf16 %v371
    %v500 = vunpack.c.l.s8.bf16 %v372
    %v501 = vunpack.c.l.s8.bf16 %v373
    %v502 = vunpack.c.h.s8.bf16 %v366
    %v503 = vunpack.c.h.s8.bf16 %v367
    %v504 = vunpack.c.h.s8.bf16 %v368
    %v505 = vunpack.c.h.s8.bf16 %v369
    %v506 = vunpack.c.h.s8.bf16 %v370
    %v507 = vunpack.c.h.s8.bf16 %v371
    %v508 = vunpack.c.h.s8.bf16 %v372
    %v509 = vunpack.c.h.s8.bf16 %v373
    %v510 = vunpack.c.l.s8.bf16 %v374
    %v511 = vunpack.c.l.s8.bf16 %v375
    %v512 = vunpack.c.l.s8.bf16 %v376
    %v513 = vunpack.c.l.s8.bf16 %v377
    %v514 = vunpack.c.l.s8.bf16 %v378
    %v515 = vunpack.c.l.s8.bf16 %v379
    %v516 = vunpack.c.l.s8.bf16 %v380
    %v517 = vunpack.c.l.s8.bf16 %v381
    %v518 = vunpack.c.h.s8.bf16 %v374
    %v519 = vunpack.c.h.s8.bf16 %v375
    %v520 = vunpack.c.h.s8.bf16 %v376
    %v521 = vunpack.c.h.s8.bf16 %v377
    %v522 = vunpack.c.h.s8.bf16 %v378
    %v523 = vunpack.c.h.s8.bf16 %v379
    %v524 = vunpack.c.h.s8.bf16 %v380
    %v525 = vunpack.c.h.s8.bf16 %v381
    %v526 = vunpack.c.l.s8.bf16 %v382
    %v527 = vunpack.c.l.s8.bf16 %v383
    %v528 = vunpack.c.l.s8.bf16 %v384
    %v529 = vunpack.c.l.s8.bf16 %v385
    %v530 = vunpack.c.l.s8.bf16 %v386
    %v531 = vunpack.c.l.s8.bf16 %v387
    %v532 = vunpack.c.l.s8.bf16 %v388
    %v533 = vunpack.c.l.s8.bf16 %v389
    %v534 = vunpack.c.h.s8.bf16 %v382
    %v535 = vunpack.c.h.s8.bf16 %v383
    %v536 = vunpack.c.h.s8.bf16 %v384
    %v537 = vunpack.c.h.s8.bf16 %v385
    %v538 = vunpack.c.h.s8.bf16 %v386
    %v539 = vunpack.c.h.s8.bf16 %v387
    %v540 = vunpack.c.h.s8.bf16 %v388
    %v541 = vunpack.c.h.s8.bf16 %v389
    %v542 = vunpack.c.l.s8.bf16 %v390
    %v543 = vunpack.c.l.s8.bf16 %v391
    %v544 = vunpack.c.l.s8.bf16 %v392
    %v545 = vunpack.c.l.s8.bf16 %v393
    %v546 = vunpack.c.l.s8.bf16 %v394
    %v547 = vunpack.c.l.s8.bf16 %v395
    %v548 = vunpack.c.l.s8.bf16 %v396
    %v549 = vunpack.c.l.s8.bf16 %v397
    %v550 = vunpack.c.h.s8.bf16 %v390
    %v551 = vunpack.c.h.s8.bf16 %v391
    %v552 = vunpack.c.h.s8.bf16 %v392
    %v553 = vunpack.c.h.s8.bf16 %v393
    %v554 = vunpack.c.h.s8.bf16 %v394
    %v555 = vunpack.c.h.s8.bf16 %v395
    %v556 = vunpack.c.h.s8.bf16 %v396
    %v557 = vunpack.c.h.s8.bf16 %v397
    %v558 = vunpack.c.l.s8.bf16 %v398
    %v559 = vunpack.c.l.s8.bf16 %v399
    %v560 = vunpack.c.l.s8.bf16 %v400
    %v561 = vunpack.c.l.s8.bf16 %v401
    %v562 = vunpack.c.l.s8.bf16 %v402
    %v563 = vunpack.c.l.s8.bf16 %v403
    %v564 = vunpack.c.l.s8.bf16 %v404
    %v565 = vunpack.c.l.s8.bf16 %v405
    %v566 = vunpack.c.h.s8.bf16 %v398
    %v567 = vunpack.c.h.s8.bf16 %v399
    %v568 = vunpack.c.h.s8.bf16 %v400
    %v569 = vunpack.c.h.s8.bf16 %v401
    %v570 = vunpack.c.h.s8.bf16 %v402
    %v571 = vunpack.c.h.s8.bf16 %v403
    %v572 = vunpack.c.h.s8.bf16 %v404
    %v573 = vunpack.c.h.s8.bf16 %v405
    %v574 = vunpack.c.l.s8.bf16 %v406
    %v575 = vunpack.c.l.s8.bf16 %v407
    %v576 = vunpack.c.l.s8.bf16 %v408
    %v577 = vunpack.c.l.s8.bf16 %v409
    %v578 = vunpack.c.l.s8.bf16 %v410
    %v579 = vunpack.c.l.s8.bf16 %v411
    %v580 = vunpack.c.l.s8.bf16 %v412
    %v581 = vunpack.c.l.s8.bf16 %v413
    %v582 = vunpack.c.h.s8.bf16 %v406
    %v583 = vunpack.c.h.s8.bf16 %v407
    %v584 = vunpack.c.h.s8.bf16 %v408
    %v585 = vunpack.c.h.s8.bf16 %v409
    %v586 = vunpack.c.h.s8.bf16 %v410
    %v587 = vunpack.c.h.s8.bf16 %v411
    %v588 = vunpack.c.h.s8.bf16 %v412
    %v589 = vunpack.c.h.s8.bf16 %v413
    %v590 = vunpack.c.l.s8.bf16 %v414
    %v591 = vunpack.c.l.s8.bf16 %v415
    %v592 = vunpack.c.l.s8.bf16 %v416
    %v593 = vunpack.c.l.s8.bf16 %v417
    %v594 = vunpack.c.l.s8.bf16 %v418
    %v595 = vunpack.c.l.s8.bf16 %v419
    %v596 = vunpack.c.l.s8.bf16 %v420
    %v597 = vunpack.c.l.s8.bf16 %v421
    %v598 = vunpack.c.h.s8.bf16 %v414
    %v599 = vunpack.c.h.s8.bf16 %v415
    %v600 = vunpack.c.h.s8.bf16 %v416
    %v601 = vunpack.c.h.s8.bf16 %v417
    %v602 = vunpack.c.h.s8.bf16 %v418
    %v603 = vunpack.c.h.s8.bf16 %v419
    %v604 = vunpack.c.h.s8.bf16 %v420
    %v605 = vunpack.c.h.s8.bf16 %v421
    %v606 = vunpack.c.l.s8.bf16 %v422
    %v607 = vunpack.c.l.s8.bf16 %v423
    %v608 = vunpack.c.l.s8.bf16 %v424
    %v609 = vunpack.c.l.s8.bf16 %v425
    %v610 = vunpack.c.l.s8.bf16 %v426
    %v611 = vunpack.c.l.s8.bf16 %v427
    %v612 = vunpack.c.l.s8.bf16 %v428
    %v613 = vunpack.c.l.s8.bf16 %v429
    %v614 = vunpack.c.h.s8.bf16 %v422
    %v615 = vunpack.c.h.s8.bf16 %v423
    %v616 = vunpack.c.h.s8.bf16 %v424
    %v617 = vunpack.c.h.s8.bf16 %v425
    %v618 = vunpack.c.h.s8.bf16 %v426
    %v619 = vunpack.c.h.s8.bf16 %v427
    %v620 = vunpack.c.h.s8.bf16 %v428
    %v621 = vunpack.c.h.s8.bf16 %v429
    %v622 = vunpack.c.l.s8.bf16 %v430
    %v623 = vunpack.c.l.s8.bf16 %v431
    %v624 = vunpack.c.l.s8.bf16 %v432
    %v625 = vunpack.c.l.s8.bf16 %v433
    %v626 = vunpack.c.l.s8.bf16 %v434
    %v627 = vunpack.c.l.s8.bf16 %v435
    %v628 = vunpack.c.l.s8.bf16 %v436
    %v629 = vunpack.c.l.s8.bf16 %v437
    %v630 = vunpack.c.h.s8.bf16 %v430
    %v631 = vunpack.c.h.s8.bf16 %v431
    %v632 = vunpack.c.h.s8.bf16 %v432
    %v633 = vunpack.c.h.s8.bf16 %v433
    %v634 = vunpack.c.h.s8.bf16 %v434
    %v635 = vunpack.c.h.s8.bf16 %v435
    %v636 = vunpack.c.h.s8.bf16 %v436
    %v637 = vunpack.c.h.s8.bf16 %v437
    %v638 = vunpack.c.l.s8.bf16 %v438
    %v639 = vunpack.c.l.s8.bf16 %v439
    %v640 = vunpack.c.l.s8.bf16 %v440
    %v641 = vunpack.c.l.s8.bf16 %v441
    %v642 = vunpack.c.l.s8.bf16 %v442
    %v643 = vunpack.c.l.s8.bf16 %v443
    %v644 = vunpack.c.l.s8.bf16 %v444
    %v645 = vunpack.c.l.s8.bf16 %v445
    %v646 = vunpack.c.h.s8.bf16 %v438
    %v647 = vunpack.c.h.s8.bf16 %v439
    %v648 = vunpack.c.h.s8.bf16 %v440
    %v649 = vunpack.c.h.s8.bf16 %v441
    %v650 = vunpack.c.h.s8.bf16 %v442
    %v651 = vunpack.c.h.s8.bf16 %v443
    %v652 = vunpack.c.h.s8.bf16 %v444
    %v653 = vunpack.c.h.s8.bf16 %v445
    %v654 = vunpack.c.l.s8.bf16 %v446
    %v655 = vunpack.c.l.s8.bf16 %v447
    %v656 = vunpack.c.l.s8.bf16 %v448
    %v657 = vunpack.c.l.s8.bf16 %v449
    %v658 = vunpack.c.l.s8.bf16 %v450
    %v659 = vunpack.c.l.s8.bf16 %v451
    %v660 = vunpack.c.l.s8.bf16 %v452
    %v661 = vunpack.c.l.s8.bf16 %v453
    %v662 = vunpack.c.h.s8.bf16 %v446
    %v663 = vunpack.c.h.s8.bf16 %v447
    %v664 = vunpack.c.h.s8.bf16 %v448
    %v665 = vunpack.c.h.s8.bf16 %v449
    %v666 = vunpack.c.h.s8.bf16 %v450
    %v667 = vunpack.c.h.s8.bf16 %v451
    %v668 = vunpack.c.h.s8.bf16 %v452
    %v669 = vunpack.c.h.s8.bf16 %v453
    %v670 = vunpack.c.l.s8.bf16 %v454
    %v671 = vunpack.c.l.s8.bf16 %v455
    %v672 = vunpack.c.l.s8.bf16 %v456
    %v673 = vunpack.c.l.s8.bf16 %v457
    %v674 = vunpack.c.l.s8.bf16 %v458
    %v675 = vunpack.c.l.s8.bf16 %v459
    %v676 = vunpack.c.l.s8.bf16 %v460
    %v677 = vunpack.c.l.s8.bf16 %v461
    %v678 = vunpack.c.h.s8.bf16 %v454
    %v679 = vunpack.c.h.s8.bf16 %v455
    %v680 = vunpack.c.h.s8.bf16 %v456
    %v681 = vunpack.c.h.s8.bf16 %v457
    %v682 = vunpack.c.h.s8.bf16 %v458
    %v683 = vunpack.c.h.s8.bf16 %v459
    %v684 = vunpack.c.h.s8.bf16 %v460
    %v685 = vunpack.c.h.s8.bf16 %v461
    %v686 = vunpack.c.l.s8.bf16 %v462
    %v687 = vunpack.c.l.s8.bf16 %v463
    %v688 = vunpack.c.l.s8.bf16 %v464
    %v689 = vunpack.c.l.s8.bf16 %v465
    %v690 = vunpack.c.l.s8.bf16 %v466
    %v691 = vunpack.c.l.s8.bf16 %v467
    %v692 = vunpack.c.l.s8.bf16 %v468
    %v693 = vunpack.c.l.s8.bf16 %v469
    %v694 = vunpack.c.h.s8.bf16 %v462
    %v695 = vunpack.c.h.s8.bf16 %v463
    %v696 = vunpack.c.h.s8.bf16 %v464
    %v697 = vunpack.c.h.s8.bf16 %v465
    %v698 = vunpack.c.h.s8.bf16 %v466
    %v699 = vunpack.c.h.s8.bf16 %v467
    %v700 = vunpack.c.h.s8.bf16 %v468
    %v701 = vunpack.c.h.s8.bf16 %v469
    %v702 = vunpack.c.l.s8.bf16 %v470
    %v703 = vunpack.c.l.s8.bf16 %v471
    %v704 = vunpack.c.l.s8.bf16 %v472
    %v705 = vunpack.c.l.s8.bf16 %v473
    %v706 = vunpack.c.l.s8.bf16 %v474
    %v707 = vunpack.c.l.s8.bf16 %v475
    %v708 = vunpack.c.l.s8.bf16 %v476
    %v709 = vunpack.c.l.s8.bf16 %v477
    %v710 = vunpack.c.h.s8.bf16 %v470
    %v711 = vunpack.c.h.s8.bf16 %v471
    %v712 = vunpack.c.h.s8.bf16 %v472
    %v713 = vunpack.c.h.s8.bf16 %v473
    %v714 = vunpack.c.h.s8.bf16 %v474
    %v715 = vunpack.c.h.s8.bf16 %v475
    %v716 = vunpack.c.h.s8.bf16 %v476
    %v717 = vunpack.c.h.s8.bf16 %v477
    %v718 = vunpack.c.l.s8.bf16 %v478
    %v719 = vunpack.c.l.s8.bf16 %v479
    %v720 = vunpack.c.l.s8.bf16 %v480
    %v721 = vunpack.c.l.s8.bf16 %v481
    %v722 = vunpack.c.l.s8.bf16 %v482
    %v723 = vunpack.c.l.s8.bf16 %v483
    %v724 = vunpack.c.l.s8.bf16 %v484
    %v725 = vunpack.c.l.s8.bf16 %v485
    %v726 = vunpack.c.h.s8.bf16 %v478
    %v727 = vunpack.c.h.s8.bf16 %v479
    %v728 = vunpack.c.h.s8.bf16 %v480
    %v729 = vunpack.c.h.s8.bf16 %v481
    %v730 = vunpack.c.h.s8.bf16 %v482
    %v731 = vunpack.c.h.s8.bf16 %v483
    %v732 = vunpack.c.h.s8.bf16 %v484
    %v733 = vunpack.c.h.s8.bf16 %v485
    %v734 = vunpack.c.l.s8.bf16 %v486
    %v735 = vunpack.c.l.s8.bf16 %v487
    %v736 = vunpack.c.l.s8.bf16 %v488
    %v737 = vunpack.c.l.s8.bf16 %v489
    %v738 = vunpack.c.l.s8.bf16 %v490
    %v739 = vunpack.c.l.s8.bf16 %v491
    %v740 = vunpack.c.l.s8.bf16 %v492
    %v741 = vunpack.c.l.s8.bf16 %v493
    %v742 = vunpack.c.h.s8.bf16 %v486
    %v743 = vunpack.c.h.s8.bf16 %v487
    %v744 = vunpack.c.h.s8.bf16 %v488
    %v745 = vunpack.c.h.s8.bf16 %v489
    %v746 = vunpack.c.h.s8.bf16 %v490
    %v747 = vunpack.c.h.s8.bf16 %v491
    %v748 = vunpack.c.h.s8.bf16 %v492
    %v749 = vunpack.c.h.s8.bf16 %v493
    %750 = vmatprep.subr.bf16.mxu0 %v551
    %751 = vmatpush1.bf16.msra.mxu0 %v550
    %752 = vmatprep.subr.bf16.mxu0 %v543
    %753 = vmatpush1.bf16.msra.mxu0 %v542
    %754 = vmatprep.subr.bf16.mxu0 %v535
    %755 = vmatpush1.bf16.msra.mxu0 %v534
    %756 = vmatprep.subr.bf16.mxu0 %v527
    %757 = vmatpush1.bf16.msra.mxu0 %v526
    %758 = vmatprep.subr.bf16.mxu0 %v519
    %759 = vmatpush1.bf16.msra.mxu0 %v518
    %760 = vmatprep.subr.bf16.mxu0 %v511
    %761 = vmatpush1.bf16.msra.mxu0 %v510
    %762 = vmatprep.subr.bf16.mxu0 %v503
    %763 = vmatpush1.bf16.msra.mxu0 %v502
    %764 = vmatprep.subr.bf16.mxu0 %v495
    %765 = vmatpush1.bf16.msra.mxu0 %v494
    %766 = vmatprep.subr.bf16.mxu0 %v615
    %767 = vmatpush2.bf16.msra.mxu0 %v614
    %768 = vmatprep.subr.bf16.mxu0 %v607
    %769 = vmatpush2.bf16.msra.mxu0 %v606
    %770 = vmatprep.subr.bf16.mxu0 %v599
    %771 = vmatpush2.bf16.msra.mxu0 %v598
    %772 = vmatprep.subr.bf16.mxu0 %v591
    %773 = vmatpush2.bf16.msra.mxu0 %v590
    %774 = vmatprep.subr.bf16.mxu0 %v583
    %775 = vmatpush2.bf16.msra.mxu0 %v582
    %776 = vmatprep.subr.bf16.mxu0 %v575
    %777 = vmatpush2.bf16.msra.mxu0 %v574
    %778 = vmatprep.subr.bf16.mxu0 %v567
    %779 = vmatpush2.bf16.msra.mxu0 %v566
    %780 = vmatprep.subr.bf16.mxu0 %v559
    %781 = vmatpush2.bf16.msra.mxu0 %v558
    %782 = vmatprep.mubr.bf16.mxu0 %v363
    %783 = vmatmul.mubr.bf16.gmra.mxu0 %v362
    %v784 = vpop.f32.mrf.mxu0
    %v785 = vadd.f32 0.0, %v784
    %v786 = vpop.f32.mrf.mxu0
    %v787 = vadd.f32 0.0, %v786
    %v788 = vpop.f32.mrf.mxu0
    %v789 = vadd.f32 0.0, %v788
    %v790 = vpop.f32.mrf.mxu0
    %v791 = vadd.f32 0.0, %v790
    %792 = vdwg.mxu0
    %793 = vmatprep.subr.bf16.mxu0 %v679
    %794 = vmatpush1.bf16.msra.mxu0 %v678
    %795 = vmatprep.subr.bf16.mxu0 %v671
    %796 = vmatpush1.bf16.msra.mxu0 %v670
    %797 = vmatprep.subr.bf16.mxu0 %v663
    %798 = vmatpush1.bf16.msra.mxu0 %v662
    %799 = vmatprep.subr.bf16.mxu0 %v655
    %800 = vmatpush1.bf16.msra.mxu0 %v654
    %801 = vmatprep.subr.bf16.mxu0 %v647
    %802 = vmatpush1.bf16.msra.mxu0 %v646
    %803 = vmatprep.subr.bf16.mxu0 %v639
    %804 = vmatpush1.bf16.msra.mxu0 %v638
    %805 = vmatprep.subr.bf16.mxu0 %v631
    %806 = vmatpush1.bf16.msra.mxu0 %v630
    %807 = vmatprep.subr.bf16.mxu0 %v623
    %808 = vmatpush1.bf16.msra.mxu0 %v622
    %809 = vmatprep.subr.bf16.mxu0 %v743
    %810 = vmatpush2.bf16.msra.mxu0 %v742
    %811 = vmatprep.subr.bf16.mxu0 %v735
    %812 = vmatpush2.bf16.msra.mxu0 %v734
    %813 = vmatprep.subr.bf16.mxu0 %v727
    %814 = vmatpush2.bf16.msra.mxu0 %v726
    %815 = vmatprep.subr.bf16.mxu0 %v719
    %816 = vmatpush2.bf16.msra.mxu0 %v718
    %817 = vmatprep.subr.bf16.mxu0 %v711
    %818 = vmatpush2.bf16.msra.mxu0 %v710
    %819 = vmatprep.subr.bf16.mxu0 %v703
    %820 = vmatpush2.bf16.msra.mxu0 %v702
    %821 = vmatprep.subr.bf16.mxu0 %v695
    %822 = vmatpush2.bf16.msra.mxu0 %v694
    %823 = vmatprep.subr.bf16.mxu0 %v687
    %824 = vmatpush2.bf16.msra.mxu0 %v686
    %825 = vmatprep.mubr.bf16.mxu0 %v365
    %826 = vmatmul.mubr.bf16.gmra.mxu0 %v364
    %v827 = vpop.f32.mrf.mxu0
    %v828 = vadd.f32 %v785, %v827
    %v829 = vpop.f32.mrf.mxu0
    %v830 = vadd.f32 %v787, %v829
    %v831 = vpop.f32.mrf.mxu0
    %v832 = vadd.f32 %v789, %v831
    %v833 = vpop.f32.mrf.mxu0
    %v834 = vadd.f32 %v791, %v833
    %835 = vdwg.mxu0
    %836 = vmatprep.subr.bf16.mxu0 %v553
    %837 = vmatpush1.bf16.msra.mxu0 %v552
    %838 = vmatprep.subr.bf16.mxu0 %v545
    %839 = vmatpush1.bf16.msra.mxu0 %v544
    %840 = vmatprep.subr.bf16.mxu0 %v537
    %841 = vmatpush1.bf16.msra.mxu0 %v536
    %842 = vmatprep.subr.bf16.mxu0 %v529
    %843 = vmatpush1.bf16.msra.mxu0 %v528
    %844 = vmatprep.subr.bf16.mxu0 %v521
    %845 = vmatpush1.bf16.msra.mxu0 %v520
    %846 = vmatprep.subr.bf16.mxu0 %v513
    %847 = vmatpush1.bf16.msra.mxu0 %v512
    %848 = vmatprep.subr.bf16.mxu0 %v505
    %849 = vmatpush1.bf16.msra.mxu0 %v504
    %850 = vmatprep.subr.bf16.mxu0 %v497
    %851 = vmatpush1.bf16.msra.mxu0 %v496
    %852 = vmatprep.subr.bf16.mxu0 %v617
    %853 = vmatpush2.bf16.msra.mxu0 %v616
    %854 = vmatprep.subr.bf16.mxu0 %v609
    %855 = vmatpush2.bf16.msra.mxu0 %v608
    %856 = vmatprep.subr.bf16.mxu0 %v601
    %857 = vmatpush2.bf16.msra.mxu0 %v600
    %858 = vmatprep.subr.bf16.mxu0 %v593
    %859 = vmatpush2.bf16.msra.mxu0 %v592
    %860 = vmatprep.subr.bf16.mxu0 %v585
    %861 = vmatpush2.bf16.msra.mxu0 %v584
    %862 = vmatprep.subr.bf16.mxu0 %v577
    %863 = vmatpush2.bf16.msra.mxu0 %v576
    %864 = vmatprep.subr.bf16.mxu0 %v569
    %865 = vmatpush2.bf16.msra.mxu0 %v568
    %866 = vmatprep.subr.bf16.mxu0 %v561
    %867 = vmatpush2.bf16.msra.mxu0 %v560
    %868 = vmatprep.mubr.bf16.mxu0 %v363
    %869 = vmatmul.mubr.bf16.gmra.mxu0 %v362
    %v870 = vpop.f32.mrf.mxu0
    %v871 = vadd.f32 0.0, %v870
    %v872 = vpop.f32.mrf.mxu0
    %v873 = vadd.f32 0.0, %v872
    %v874 = vpop.f32.mrf.mxu0
    %v875 = vadd.f32 0.0, %v874
    %v876 = vpop.f32.mrf.mxu0
    %v877 = vadd.f32 0.0, %v876
    %878 = vdwg.mxu0
    %879 = vmatprep.subr.bf16.mxu0 %v681
    %880 = vmatpush1.bf16.msra.mxu0 %v680
    %881 = vmatprep.subr.bf16.mxu0 %v673
    %882 = vmatpush1.bf16.msra.mxu0 %v672
    %883 = vmatprep.subr.bf16.mxu0 %v665
    %884 = vmatpush1.bf16.msra.mxu0 %v664
    %885 = vmatprep.subr.bf16.mxu0 %v657
    %886 = vmatpush1.bf16.msra.mxu0 %v656
    %887 = vmatprep.subr.bf16.mxu0 %v649
    %888 = vmatpush1.bf16.msra.mxu0 %v648
    %889 = vmatprep.subr.bf16.mxu0 %v641
    %890 = vmatpush1.bf16.msra.mxu0 %v640
    %891 = vmatprep.subr.bf16.mxu0 %v633
    %892 = vmatpush1.bf16.msra.mxu0 %v632
    %893 = vmatprep.subr.bf16.mxu0 %v625
    %894 = vmatpush1.bf16.msra.mxu0 %v624
    %895 = vmatprep.subr.bf16.mxu0 %v745
    %896 = vmatpush2.bf16.msra.mxu0 %v744
    %897 = vmatprep.subr.bf16.mxu0 %v737
    %898 = vmatpush2.bf16.msra.mxu0 %v736
    %899 = vmatprep.subr.bf16.mxu0 %v729
    %900 = vmatpush2.bf16.msra.mxu0 %v728
    %901 = vmatprep.subr.bf16.mxu0 %v721
    %902 = vmatpush2.bf16.msra.mxu0 %v720
    %903 = vmatprep.subr.bf16.mxu0 %v713
    %904 = vmatpush2.bf16.msra.mxu0 %v712
    %905 = vmatprep.subr.bf16.mxu0 %v705
    %906 = vmatpush2.bf16.msra.mxu0 %v704
    %907 = vmatprep.subr.bf16.mxu0 %v697
    %908 = vmatpush2.bf16.msra.mxu0 %v696
    %909 = vmatprep.subr.bf16.mxu0 %v689
    %910 = vmatpush2.bf16.msra.mxu0 %v688
    %911 = vmatprep.mubr.bf16.mxu0 %v365
    %912 = vmatmul.mubr.bf16.gmra.mxu0 %v364
    %v913 = vpop.f32.mrf.mxu0
    %v914 = vadd.f32 %v871, %v913
    %v915 = vpop.f32.mrf.mxu0
    %v916 = vadd.f32 %v873, %v915
    %v917 = vpop.f32.mrf.mxu0
    %v918 = vadd.f32 %v875, %v917
    %v919 = vpop.f32.mrf.mxu0
    %v920 = vadd.f32 %v877, %v919
    %921 = vdwg.mxu0
    %922 = vmatprep.subr.bf16.mxu0 %v555
    %923 = vmatpush1.bf16.msra.mxu0 %v554
    %924 = vmatprep.subr.bf16.mxu0 %v547
    %925 = vmatpush1.bf16.msra.mxu0 %v546
    %926 = vmatprep.subr.bf16.mxu0 %v539
    %927 = vmatpush1.bf16.msra.mxu0 %v538
    %928 = vmatprep.subr.bf16.mxu0 %v531
    %929 = vmatpush1.bf16.msra.mxu0 %v530
    %930 = vmatprep.subr.bf16.mxu0 %v523
    %931 = vmatpush1.bf16.msra.mxu0 %v522
    %932 = vmatprep.subr.bf16.mxu0 %v515
    %933 = vmatpush1.bf16.msra.mxu0 %v514
    %934 = vmatprep.subr.bf16.mxu0 %v507
    %935 = vmatpush1.bf16.msra.mxu0 %v506
    %936 = vmatprep.subr.bf16.mxu0 %v499
    %937 = vmatpush1.bf16.msra.mxu0 %v498
    %938 = vmatprep.subr.bf16.mxu0 %v619
    %939 = vmatpush2.bf16.msra.mxu0 %v618
    %940 = vmatprep.subr.bf16.mxu0 %v611
    %941 = vmatpush2.bf16.msra.mxu0 %v610
    %942 = vmatprep.subr.bf16.mxu0 %v603
    %943 = vmatpush2.bf16.msra.mxu0 %v602
    %944 = vmatprep.subr.bf16.mxu0 %v595
    %945 = vmatpush2.bf16.msra.mxu0 %v594
    %946 = vmatprep.subr.bf16.mxu0 %v587
    %947 = vmatpush2.bf16.msra.mxu0 %v586
    %948 = vmatprep.subr.bf16.mxu0 %v579
    %949 = vmatpush2.bf16.msra.mxu0 %v578
    %950 = vmatprep.subr.bf16.mxu0 %v571
    %951 = vmatpush2.bf16.msra.mxu0 %v570
    %952 = vmatprep.subr.bf16.mxu0 %v563
    %953 = vmatpush2.bf16.msra.mxu0 %v562
    %954 = vmatprep.mubr.bf16.mxu0 %v363
    %955 = vmatmul.mubr.bf16.gmra.mxu0 %v362
    %v956 = vpop.f32.mrf.mxu0
    %v957 = vadd.f32 0.0, %v956
    %v958 = vpop.f32.mrf.mxu0
    %v959 = vadd.f32 0.0, %v958
    %v960 = vpop.f32.mrf.mxu0
    %v961 = vadd.f32 0.0, %v960
    %v962 = vpop.f32.mrf.mxu0
    %v963 = vadd.f32 0.0, %v962
    %964 = vdwg.mxu0
    %965 = vmatprep.subr.bf16.mxu0 %v683
    %966 = vmatpush1.bf16.msra.mxu0 %v682
    %967 = vmatprep.subr.bf16.mxu0 %v675
    %968 = vmatpush1.bf16.msra.mxu0 %v674
    %969 = vmatprep.subr.bf16.mxu0 %v667
    %970 = vmatpush1.bf16.msra.mxu0 %v666
    %971 = vmatprep.subr.bf16.mxu0 %v659
    %972 = vmatpush1.bf16.msra.mxu0 %v658
    %973 = vmatprep.subr.bf16.mxu0 %v651
    %974 = vmatpush1.bf16.msra.mxu0 %v650
    %975 = vmatprep.subr.bf16.mxu0 %v643
    %976 = vmatpush1.bf16.msra.mxu0 %v642
    %977 = vmatprep.subr.bf16.mxu0 %v635
    %978 = vmatpush1.bf16.msra.mxu0 %v634
    %979 = vmatprep.subr.bf16.mxu0 %v627
    %980 = vmatpush1.bf16.msra.mxu0 %v626
    %981 = vmatprep.subr.bf16.mxu0 %v747
    %982 = vmatpush2.bf16.msra.mxu0 %v746
    %983 = vmatprep.subr.bf16.mxu0 %v739
    %984 = vmatpush2.bf16.msra.mxu0 %v738
    %985 = vmatprep.subr.bf16.mxu0 %v731
    %986 = vmatpush2.bf16.msra.mxu0 %v730
    %987 = vmatprep.subr.bf16.mxu0 %v723
    %988 = vmatpush2.bf16.msra.mxu0 %v722
    %989 = vmatprep.subr.bf16.mxu0 %v715
    %990 = vmatpush2.bf16.msra.mxu0 %v714
    %991 = vmatprep.subr.bf16.mxu0 %v707
    %992 = vmatpush2.bf16.msra.mxu0 %v706
    %993 = vmatprep.subr.bf16.mxu0 %v699
    %994 = vmatpush2.bf16.msra.mxu0 %v698
    %995 = vmatprep.subr.bf16.mxu0 %v691
    %996 = vmatpush2.bf16.msra.mxu0 %v690
    %997 = vmatprep.mubr.bf16.mxu0 %v365
    %998 = vmatmul.mubr.bf16.gmra.mxu0 %v364
    %v999 = vpop.f32.mrf.mxu0
    %v1000 = vadd.f32 %v957, %v999
    %v1001 = vpop.f32.mrf.mxu0
    %v1002 = vadd.f32 %v959, %v1001
    %v1003 = vpop.f32.mrf.mxu0
    %v1004 = vadd.f32 %v961, %v1003
    %v1005 = vpop.f32.mrf.mxu0
    %v1006 = vadd.f32 %v963, %v1005
    %1007 = vdwg.mxu0
    %1008 = vmatprep.subr.bf16.mxu0 %v557
    %1009 = vmatpush1.bf16.msra.mxu0 %v556
    %1010 = vmatprep.subr.bf16.mxu0 %v549
    %1011 = vmatpush1.bf16.msra.mxu0 %v548
    %1012 = vmatprep.subr.bf16.mxu0 %v541
    %1013 = vmatpush1.bf16.msra.mxu0 %v540
    %1014 = vmatprep.subr.bf16.mxu0 %v533
    %1015 = vmatpush1.bf16.msra.mxu0 %v532
    %1016 = vmatprep.subr.bf16.mxu0 %v525
    %1017 = vmatpush1.bf16.msra.mxu0 %v524
    %1018 = vmatprep.subr.bf16.mxu0 %v517
    %1019 = vmatpush1.bf16.msra.mxu0 %v516
    %1020 = vmatprep.subr.bf16.mxu0 %v509
    %1021 = vmatpush1.bf16.msra.mxu0 %v508
    %1022 = vmatprep.subr.bf16.mxu0 %v501
    %1023 = vmatpush1.bf16.msra.mxu0 %v500
    %1024 = vmatprep.subr.bf16.mxu0 %v621
    %1025 = vmatpush2.bf16.msra.mxu0 %v620
    %1026 = vmatprep.subr.bf16.mxu0 %v613
    %1027 = vmatpush2.bf16.msra.mxu0 %v612
    %1028 = vmatprep.subr.bf16.mxu0 %v605
    %1029 = vmatpush2.bf16.msra.mxu0 %v604
    %1030 = vmatprep.subr.bf16.mxu0 %v597
    %1031 = vmatpush2.bf16.msra.mxu0 %v596
    %1032 = vmatprep.subr.bf16.mxu0 %v589
    %1033 = vmatpush2.bf16.msra.mxu0 %v588
    %1034 = vmatprep.subr.bf16.mxu0 %v581
    %1035 = vmatpush2.bf16.msra.mxu0 %v580
    %1036 = vmatprep.subr.bf16.mxu0 %v573
    %1037 = vmatpush2.bf16.msra.mxu0 %v572
    %1038 = vmatprep.subr.bf16.mxu0 %v565
    %1039 = vmatpush2.bf16.msra.mxu0 %v564
    %1040 = vmatprep.mubr.bf16.mxu0 %v363
    %1041 = vmatmul.mubr.bf16.gmra.mxu0 %v362
    %v1042 = vpop.f32.mrf.mxu0
    %v1043 = vadd.f32 0.0, %v1042
    %v1044 = vpop.f32.mrf.mxu0
    %v1045 = vadd.f32 0.0, %v1044
    %v1046 = vpop.f32.mrf.mxu0
    %v1047 = vadd.f32 0.0, %v1046
    %v1048 = vpop.f32.mrf.mxu0
    %v1049 = vadd.f32 0.0, %v1048
    %1050 = vdwg.mxu0
    %1051 = vmatprep.subr.bf16.mxu0 %v685
    %1052 = vmatpush1.bf16.msra.mxu0 %v684
    %1053 = vmatprep.subr.bf16.mxu0 %v677
    %1054 = vmatpush1.bf16.msra.mxu0 %v676
    %1055 = vmatprep.subr.bf16.mxu0 %v669
    %1056 = vmatpush1.bf16.msra.mxu0 %v668
    %1057 = vmatprep.subr.bf16.mxu0 %v661
    %1058 = vmatpush1.bf16.msra.mxu0 %v660
    %1059 = vmatprep.subr.bf16.mxu0 %v653
    %1060 = vmatpush1.bf16.msra.mxu0 %v652
    %1061 = vmatprep.subr.bf16.mxu0 %v645
    %1062 = vmatpush1.bf16.msra.mxu0 %v644
    %1063 = vmatprep.subr.bf16.mxu0 %v637
    %1064 = vmatpush1.bf16.msra.mxu0 %v636
    %1065 = vmatprep.subr.bf16.mxu0 %v629
    %1066 = vmatpush1.bf16.msra.mxu0 %v628
    %1067 = vmatprep.subr.bf16.mxu0 %v749
    %1068 = vmatpush2.bf16.msra.mxu0 %v748
    %1069 = vmatprep.subr.bf16.mxu0 %v741
    %1070 = vmatpush2.bf16.msra.mxu0 %v740
    %1071 = vmatprep.subr.bf16.mxu0 %v733
    %1072 = vmatpush2.bf16.msra.mxu0 %v732
    %1073 = vmatprep.subr.bf16.mxu0 %v725
    %1074 = vmatpush2.bf16.msra.mxu0 %v724
    %1075 = vmatprep.subr.bf16.mxu0 %v717
    %1076 = vmatpush2.bf16.msra.mxu0 %v716
    %1077 = vmatprep.subr.bf16.mxu0 %v709
    %1078 = vmatpush2.bf16.msra.mxu0 %v708
    %1079 = vmatprep.subr.bf16.mxu0 %v701
    %1080 = vmatpush2.bf16.msra.mxu0 %v700
    %1081 = vmatprep.subr.bf16.mxu0 %v693
    %1082 = vmatpush2.bf16.msra.mxu0 %v692
    %1083 = vmatprep.mubr.bf16.mxu0 %v365
    %1084 = vmatmul.mubr.bf16.gmra.mxu0 %v364
    %v1085 = vpop.f32.mrf.mxu0
    %v1086 = vadd.f32 %v1043, %v1085
    %v1087 = vpop.f32.mrf.mxu0
    %v1088 = vadd.f32 %v1045, %v1087
    %v1089 = vpop.f32.mrf.mxu0
    %v1090 = vadd.f32 %v1047, %v1089
    %v1091 = vpop.f32.mrf.mxu0
    %v1092 = vadd.f32 %v1049, %v1091
    %1093 = vdwg.mxu0
    %v1094 = vld [vmem:[%s5] sm:$0xff]
    %v1096 = vlaneseq
    %v1097 = vshrl.u32 %v1096, 7
    %v1098 = vsub.s32 0, %v1097
    %v1099 = vrot.slane %v1094, %v1098
    %v1100 = vlaneseq
    %v1101 = vshrl.u32 %v1100, 7
    %v1102 = vsub.s32 1, %v1101
    %v1103 = vrot.slane %v1094, %v1102
    %v1104 = vlaneseq
    %v1105 = vshrl.u32 %v1104, 7
    %v1106 = vsub.s32 2, %v1105
    %v1107 = vrot.slane %v1094, %v1106
    %v1108 = vlaneseq
    %v1109 = vshrl.u32 %v1108, 7
    %v1110 = vsub.s32 3, %v1109
    %v1111 = vrot.slane %v1094, %v1110
    %v1112 = vlaneseq
    %v1113 = vshrl.u32 %v1112, 7
    %v1114 = vsub.s32 4, %v1113
    %v1115 = vrot.slane %v1094, %v1114
    %v1116 = vlaneseq
    %v1117 = vshrl.u32 %v1116, 7
    %v1118 = vsub.s32 5, %v1117
    %v1119 = vrot.slane %v1094, %v1118
    %v1120 = vlaneseq
    %v1121 = vshrl.u32 %v1120, 7
    %v1122 = vsub.s32 6, %v1121
    %v1123 = vrot.slane %v1094, %v1122
    %v1124 = vlaneseq
    %v1125 = vshrl.u32 %v1124, 7
    %v1126 = vsub.s32 7, %v1125
    %v1127 = vrot.slane %v1094, %v1126
    %v1136 = vmul.f32 %v828, %v1099
    %v1137 = vmul.f32 %v830, %v1103
    %v1138 = vmul.f32 %v914, %v1107
    %v1139 = vmul.f32 %v916, %v1111
    %v1140 = vmul.f32 %v1000, %v1115
    %v1141 = vmul.f32 %v1002, %v1119
    %v1142 = vmul.f32 %v1086, %v1123
    %v1143 = vmul.f32 %v1088, %v1127
    %v1144 = vmul.f32 %v832, %v1099
    %v1145 = vmul.f32 %v834, %v1103
    %v1146 = vmul.f32 %v918, %v1107
    %v1147 = vmul.f32 %v920, %v1111
    %v1148 = vmul.f32 %v1004, %v1115
    %v1149 = vmul.f32 %v1006, %v1119
    %v1150 = vmul.f32 %v1090, %v1123
    %v1151 = vmul.f32 %v1092, %v1127
    %v1152 = vld [vmem:[#allocation6] sm:$0xff]
    %v1154 = vlaneseq
    %v1155 = vshrl.u32 %v1154, 7
    %v1156 = vsub.s32 0, %v1155
    %v1157 = vrot.slane %v1152, %v1156
    %v1158 = vlaneseq
    %v1159 = vshrl.u32 %v1158, 7
    %v1160 = vsub.s32 1, %v1159
    %v1161 = vrot.slane %v1152, %v1160
    %v1162 = vlaneseq
    %v1163 = vshrl.u32 %v1162, 7
    %v1164 = vsub.s32 2, %v1163
    %v1165 = vrot.slane %v1152, %v1164
    %v1166 = vlaneseq
    %v1167 = vshrl.u32 %v1166, 7
    %v1168 = vsub.s32 3, %v1167
    %v1169 = vrot.slane %v1152, %v1168
    %v1170 = vlaneseq
    %v1171 = vshrl.u32 %v1170, 7
    %v1172 = vsub.s32 4, %v1171
    %v1173 = vrot.slane %v1152, %v1172
    %v1174 = vlaneseq
    %v1175 = vshrl.u32 %v1174, 7
    %v1176 = vsub.s32 5, %v1175
    %v1177 = vrot.slane %v1152, %v1176
    %v1178 = vlaneseq
    %v1179 = vshrl.u32 %v1178, 7
    %v1180 = vsub.s32 6, %v1179
    %v1181 = vrot.slane %v1152, %v1180
    %v1182 = vlaneseq
    %v1183 = vshrl.u32 %v1182, 7
    %v1184 = vsub.s32 7, %v1183
    %v1185 = vrot.slane %v1152, %v1184
    %v1194 = vadd.f32 %v1136, %v1157
    %v1195 = vadd.f32 %v1137, %v1161
    %v1196 = vadd.f32 %v1138, %v1165
    %v1197 = vadd.f32 %v1139, %v1169
    %v1198 = vadd.f32 %v1140, %v1173
    %v1199 = vadd.f32 %v1141, %v1177
    %v1200 = vadd.f32 %v1142, %v1181
    %v1201 = vadd.f32 %v1143, %v1185
    %v1202 = vadd.f32 %v1144, %v1157
    %v1203 = vadd.f32 %v1145, %v1161
    %v1204 = vadd.f32 %v1146, %v1165
    %v1205 = vadd.f32 %v1147, %v1169
    %v1206 = vadd.f32 %v1148, %v1173
    %v1207 = vadd.f32 %v1149, %v1177
    %v1208 = vadd.f32 %v1150, %v1181
    %v1209 = vadd.f32 %v1151, %v1185
    %v1210 = vmax.f32 %v1194, 0.0
    %v1211 = vmax.f32 %v1195, 0.0
    %v1212 = vmax.f32 %v1196, 0.0
    %v1213 = vmax.f32 %v1197, 0.0
    %v1214 = vmax.f32 %v1198, 0.0
    %v1215 = vmax.f32 %v1199, 0.0
    %v1216 = vmax.f32 %v1200, 0.0
    %v1217 = vmax.f32 %v1201, 0.0
    %v1218 = vmax.f32 %v1202, 0.0
    %v1219 = vmax.f32 %v1203, 0.0
    %v1220 = vmax.f32 %v1204, 0.0
    %v1221 = vmax.f32 %v1205, 0.0
    %v1222 = vmax.f32 %v1206, 0.0
    %v1223 = vmax.f32 %v1207, 0.0
    %v1224 = vmax.f32 %v1208, 0.0
    %v1225 = vmax.f32 %v1209, 0.0
    %v1226 = vpack.c.bf16 %v1218, %v1210
    %v1227 = vpack.c.bf16 %v1219, %v1211
    %v1228 = vpack.c.bf16 %v1220, %v1212
    %v1229 = vpack.c.bf16 %v1221, %v1213
    %v1230 = vpack.c.bf16 %v1222, %v1214
    %v1231 = vpack.c.bf16 %v1223, %v1215
    %v1232 = vpack.c.bf16 %v1224, %v1216
    %v1233 = vpack.c.bf16 %v1225, %v1217
    %v1234 = vld [vmem:[#allocation7] sm:$0xff]
    %v1235 = vld [vmem:[#allocation7 + $0x8] sm:$0xff]
    %v1236 = vld [vmem:[#allocation7 + $0x10] sm:$0xff]
    %v1237 = vld [vmem:[#allocation7 + $0x18] sm:$0xff]
    %v1238 = vld [vmem:[#allocation7 + $0x20] sm:$0xff]
    %v1239 = vld [vmem:[#allocation7 + $0x28] sm:$0xff]
    %v1240 = vld [vmem:[#allocation7 + $0x30] sm:$0xff]
    %v1241 = vld [vmem:[#allocation7 + $0x38] sm:$0xff]
    %v1242 = vld [vmem:[#allocation7 + $0x40] sm:$0xff]
    %v1243 = vld [vmem:[#allocation7 + $0x48] sm:$0xff]
    %v1244 = vld [vmem:[#allocation7 + $0x50] sm:$0xff]
    %v1245 = vld [vmem:[#allocation7 + $0x58] sm:$0xff]
    %v1246 = vld [vmem:[#allocation7 + $0x60] sm:$0xff]
    %v1247 = vld [vmem:[#allocation7 + $0x68] sm:$0xff]
    %v1248 = vld [vmem:[#allocation7 + $0x70] sm:$0xff]
    %v1249 = vld [vmem:[#allocation7 + $0x78] sm:$0xff]
    %v1250 = vld [vmem:[#allocation7 + $0x80] sm:$0xff]
    %v1251 = vld [vmem:[#allocation7 + $0x88] sm:$0xff]
    %v1252 = vld [vmem:[#allocation7 + $0x90] sm:$0xff]
    %v1253 = vld [vmem:[#allocation7 + $0x98] sm:$0xff]
    %v1254 = vld [vmem:[#allocation7 + $0xa0] sm:$0xff]
    %v1255 = vld [vmem:[#allocation7 + $0xa8] sm:$0xff]
    %v1256 = vld [vmem:[#allocation7 + $0xb0] sm:$0xff]
    %v1257 = vld [vmem:[#allocation7 + $0xb8] sm:$0xff]
    %v1258 = vld [vmem:[#allocation7 + $0xc0] sm:$0xff]
    %v1259 = vld [vmem:[#allocation7 + $0xc8] sm:$0xff]
    %v1260 = vld [vmem:[#allocation7 + $0xd0] sm:$0xff]
    %v1261 = vld [vmem:[#allocation7 + $0xd8] sm:$0xff]
    %v1262 = vld [vmem:[#allocation7 + $0xe0] sm:$0xff]
    %v1263 = vld [vmem:[#allocation7 + $0xe8] sm:$0xff]
    %v1264 = vld [vmem:[#allocation7 + $0xf0] sm:$0xff]
    %v1265 = vld [vmem:[#allocation7 + $0xf8] sm:$0xff]
    %v1266 = vld [vmem:[#allocation7 + $0x100] sm:$0xff]
    %v1267 = vld [vmem:[#allocation7 + $0x108] sm:$0xff]
    %v1268 = vld [vmem:[#allocation7 + $0x110] sm:$0xff]
    %v1269 = vld [vmem:[#allocation7 + $0x118] sm:$0xff]
    %v1270 = vld [vmem:[#allocation7 + $0x120] sm:$0xff]
    %v1271 = vld [vmem:[#allocation7 + $0x128] sm:$0xff]
    %v1272 = vld [vmem:[#allocation7 + $0x130] sm:$0xff]
    %v1273 = vld [vmem:[#allocation7 + $0x138] sm:$0xff]
    %v1274 = vld [vmem:[#allocation7 + $0x140] sm:$0xff]
    %v1275 = vld [vmem:[#allocation7 + $0x148] sm:$0xff]
    %v1276 = vld [vmem:[#allocation7 + $0x150] sm:$0xff]
    %v1277 = vld [vmem:[#allocation7 + $0x158] sm:$0xff]
    %v1278 = vld [vmem:[#allocation7 + $0x160] sm:$0xff]
    %v1279 = vld [vmem:[#allocation7 + $0x168] sm:$0xff]
    %v1280 = vld [vmem:[#allocation7 + $0x170] sm:$0xff]
    %v1281 = vld [vmem:[#allocation7 + $0x178] sm:$0xff]
    %v1282 = vld [vmem:[#allocation7 + $0x180] sm:$0xff]
    %v1283 = vld [vmem:[#allocation7 + $0x188] sm:$0xff]
    %v1284 = vld [vmem:[#allocation7 + $0x190] sm:$0xff]
    %v1285 = vld [vmem:[#allocation7 + $0x198] sm:$0xff]
    %v1286 = vld [vmem:[#allocation7 + $0x1a0] sm:$0xff]
    %v1287 = vld [vmem:[#allocation7 + $0x1a8] sm:$0xff]
    %v1288 = vld [vmem:[#allocation7 + $0x1b0] sm:$0xff]
    %v1289 = vld [vmem:[#allocation7 + $0x1b8] sm:$0xff]
    %v1290 = vld [vmem:[#allocation7 + $0x1c0] sm:$0xff]
    %v1291 = vld [vmem:[#allocation7 + $0x1c8] sm:$0xff]
    %v1292 = vld [vmem:[#allocation7 + $0x1d0] sm:$0xff]
    %v1293 = vld [vmem:[#allocation7 + $0x1d8] sm:$0xff]
    %v1294 = vld [vmem:[#allocation7 + $0x1e0] sm:$0xff]
    %v1295 = vld [vmem:[#allocation7 + $0x1e8] sm:$0xff]
    %v1296 = vld [vmem:[#allocation7 + $0x1f0] sm:$0xff]
    %v1297 = vld [vmem:[#allocation7 + $0x1f8] sm:$0xff]
    %v1298 = vld [vmem:[#allocation7 + $0x200] sm:$0xff]
    %v1299 = vld [vmem:[#allocation7 + $0x208] sm:$0xff]
    %v1300 = vld [vmem:[#allocation7 + $0x210] sm:$0xff]
    %v1301 = vld [vmem:[#allocation7 + $0x218] sm:$0xff]
    %v1302 = vld [vmem:[#allocation7 + $0x220] sm:$0xff]
    %v1303 = vld [vmem:[#allocation7 + $0x228] sm:$0xff]
    %v1304 = vld [vmem:[#allocation7 + $0x230] sm:$0xff]
    %v1305 = vld [vmem:[#allocation7 + $0x238] sm:$0xff]
    %v1306 = vld [vmem:[#allocation7 + $0x240] sm:$0xff]
    %v1307 = vld [vmem:[#allocation7 + $0x248] sm:$0xff]
    %v1308 = vld [vmem:[#allocation7 + $0x250] sm:$0xff]
    %v1309 = vld [vmem:[#allocation7 + $0x258] sm:$0xff]
    %v1310 = vld [vmem:[#allocation7 + $0x260] sm:$0xff]
    %v1311 = vld [vmem:[#allocation7 + $0x268] sm:$0xff]
    %v1312 = vld [vmem:[#allocation7 + $0x270] sm:$0xff]
    %v1313 = vld [vmem:[#allocation7 + $0x278] sm:$0xff]
    %v1314 = vld [vmem:[#allocation7 + $0x280] sm:$0xff]
    %v1315 = vld [vmem:[#allocation7 + $0x288] sm:$0xff]
    %v1316 = vld [vmem:[#allocation7 + $0x290] sm:$0xff]
    %v1317 = vld [vmem:[#allocation7 + $0x298] sm:$0xff]
    %v1318 = vld [vmem:[#allocation7 + $0x2a0] sm:$0xff]
    %v1319 = vld [vmem:[#allocation7 + $0x2a8] sm:$0xff]
    %v1320 = vld [vmem:[#allocation7 + $0x2b0] sm:$0xff]
    %v1321 = vld [vmem:[#allocation7 + $0x2b8] sm:$0xff]
    %v1322 = vld [vmem:[#allocation7 + $0x2c0] sm:$0xff]
    %v1323 = vld [vmem:[#allocation7 + $0x2c8] sm:$0xff]
    %v1324 = vld [vmem:[#allocation7 + $0x2d0] sm:$0xff]
    %v1325 = vld [vmem:[#allocation7 + $0x2d8] sm:$0xff]
    %v1326 = vld [vmem:[#allocation7 + $0x2e0] sm:$0xff]
    %v1327 = vld [vmem:[#allocation7 + $0x2e8] sm:$0xff]
    %v1328 = vld [vmem:[#allocation7 + $0x2f0] sm:$0xff]
    %v1329 = vld [vmem:[#allocation7 + $0x2f8] sm:$0xff]
    %v1330 = vld [vmem:[#allocation7 + $0x300] sm:$0xff]
    %v1331 = vld [vmem:[#allocation7 + $0x308] sm:$0xff]
    %v1332 = vld [vmem:[#allocation7 + $0x310] sm:$0xff]
    %v1333 = vld [vmem:[#allocation7 + $0x318] sm:$0xff]
    %v1334 = vld [vmem:[#allocation7 + $0x320] sm:$0xff]
    %v1335 = vld [vmem:[#allocation7 + $0x328] sm:$0xff]
    %v1336 = vld [vmem:[#allocation7 + $0x330] sm:$0xff]
    %v1337 = vld [vmem:[#allocation7 + $0x338] sm:$0xff]
    %v1338 = vld [vmem:[#allocation7 + $0x340] sm:$0xff]
    %v1339 = vld [vmem:[#allocation7 + $0x348] sm:$0xff]
    %v1340 = vld [vmem:[#allocation7 + $0x350] sm:$0xff]
    %v1341 = vld [vmem:[#allocation7 + $0x358] sm:$0xff]
    %v1342 = vld [vmem:[#allocation7 + $0x360] sm:$0xff]
    %v1343 = vld [vmem:[#allocation7 + $0x368] sm:$0xff]
    %v1344 = vld [vmem:[#allocation7 + $0x370] sm:$0xff]
    %v1345 = vld [vmem:[#allocation7 + $0x378] sm:$0xff]
    %v1346 = vld [vmem:[#allocation7 + $0x380] sm:$0xff]
    %v1347 = vld [vmem:[#allocation7 + $0x388] sm:$0xff]
    %v1348 = vld [vmem:[#allocation7 + $0x390] sm:$0xff]
    %v1349 = vld [vmem:[#allocation7 + $0x398] sm:$0xff]
    %v1350 = vld [vmem:[#allocation7 + $0x3a0] sm:$0xff]
    %v1351 = vld [vmem:[#allocation7 + $0x3a8] sm:$0xff]
    %v1352 = vld [vmem:[#allocation7 + $0x3b0] sm:$0xff]
    %v1353 = vld [vmem:[#allocation7 + $0x3b8] sm:$0xff]
    %v1354 = vld [vmem:[#allocation7 + $0x3c0] sm:$0xff]
    %v1355 = vld [vmem:[#allocation7 + $0x3c8] sm:$0xff]
    %v1356 = vld [vmem:[#allocation7 + $0x3d0] sm:$0xff]
    %v1357 = vld [vmem:[#allocation7 + $0x3d8] sm:$0xff]
    %v1358 = vld [vmem:[#allocation7 + $0x3e0] sm:$0xff]
    %v1359 = vld [vmem:[#allocation7 + $0x3e8] sm:$0xff]
    %v1360 = vld [vmem:[#allocation7 + $0x3f0] sm:$0xff]
    %v1361 = vld [vmem:[#allocation7 + $0x3f8] sm:$0xff]
    %v1362 = vunpack.c.l.s8.bf16 %v1234
    %v1363 = vunpack.c.l.s8.bf16 %v1235
    %v1364 = vunpack.c.l.s8.bf16 %v1236
    %v1365 = vunpack.c.l.s8.bf16 %v1237
    %v1366 = vunpack.c.h.s8.bf16 %v1234
    %v1367 = vunpack.c.h.s8.bf16 %v1235
    %v1368 = vunpack.c.h.s8.bf16 %v1236
    %v1369 = vunpack.c.h.s8.bf16 %v1237
    %v1370 = vunpack.c.l.s8.bf16 %v1238
    %v1371 = vunpack.c.l.s8.bf16 %v1239
    %v1372 = vunpack.c.l.s8.bf16 %v1240
    %v1373 = vunpack.c.l.s8.bf16 %v1241
    %v1374 = vunpack.c.h.s8.bf16 %v1238
    %v1375 = vunpack.c.h.s8.bf16 %v1239
    %v1376 = vunpack.c.h.s8.bf16 %v1240
    %v1377 = vunpack.c.h.s8.bf16 %v1241
    %v1378 = vunpack.c.l.s8.bf16 %v1242
    %v1379 = vunpack.c.l.s8.bf16 %v1243
    %v1380 = vunpack.c.l.s8.bf16 %v1244
    %v1381 = vunpack.c.l.s8.bf16 %v1245
    %v1382 = vunpack.c.h.s8.bf16 %v1242
    %v1383 = vunpack.c.h.s8.bf16 %v1243
    %v1384 = vunpack.c.h.s8.bf16 %v1244
    %v1385 = vunpack.c.h.s8.bf16 %v1245
    %v1386 = vunpack.c.l.s8.bf16 %v1246
    %v1387 = vunpack.c.l.s8.bf16 %v1247
    %v1388 = vunpack.c.l.s8.bf16 %v1248
    %v1389 = vunpack.c.l.s8.bf16 %v1249
    %v1390 = vunpack.c.h.s8.bf16 %v1246
    %v1391 = vunpack.c.h.s8.bf16 %v1247
    %v1392 = vunpack.c.h.s8.bf16 %v1248
    %v1393 = vunpack.c.h.s8.bf16 %v1249
    %v1394 = vunpack.c.l.s8.bf16 %v1250
    %v1395 = vunpack.c.l.s8.bf16 %v1251
    %v1396 = vunpack.c.l.s8.bf16 %v1252
    %v1397 = vunpack.c.l.s8.bf16 %v1253
    %v1398 = vunpack.c.h.s8.bf16 %v1250
    %v1399 = vunpack.c.h.s8.bf16 %v1251
    %v1400 = vunpack.c.h.s8.bf16 %v1252
    %v1401 = vunpack.c.h.s8.bf16 %v1253
    %v1402 = vunpack.c.l.s8.bf16 %v1254
    %v1403 = vunpack.c.l.s8.bf16 %v1255
    %v1404 = vunpack.c.l.s8.bf16 %v1256
    %v1405 = vunpack.c.l.s8.bf16 %v1257
    %v1406 = vunpack.c.h.s8.bf16 %v1254
    %v1407 = vunpack.c.h.s8.bf16 %v1255
    %v1408 = vunpack.c.h.s8.bf16 %v1256
    %v1409 = vunpack.c.h.s8.bf16 %v1257
    %v1410 = vunpack.c.l.s8.bf16 %v1258
    %v1411 = vunpack.c.l.s8.bf16 %v1259
    %v1412 = vunpack.c.l.s8.bf16 %v1260
    %v1413 = vunpack.c.l.s8.bf16 %v1261
    %v1414 = vunpack.c.h.s8.bf16 %v1258
    %v1415 = vunpack.c.h.s8.bf16 %v1259
    %v1416 = vunpack.c.h.s8.bf16 %v1260
    %v1417 = vunpack.c.h.s8.bf16 %v1261
    %v1418 = vunpack.c.l.s8.bf16 %v1262
    %v1419 = vunpack.c.l.s8.bf16 %v1263
    %v1420 = vunpack.c.l.s8.bf16 %v1264
    %v1421 = vunpack.c.l.s8.bf16 %v1265
    %v1422 = vunpack.c.h.s8.bf16 %v1262
    %v1423 = vunpack.c.h.s8.bf16 %v1263
    %v1424 = vunpack.c.h.s8.bf16 %v1264
    %v1425 = vunpack.c.h.s8.bf16 %v1265
    %v1426 = vunpack.c.l.s8.bf16 %v1266
    %v1427 = vunpack.c.l.s8.bf16 %v1267
    %v1428 = vunpack.c.l.s8.bf16 %v1268
    %v1429 = vunpack.c.l.s8.bf16 %v1269
    %v1430 = vunpack.c.h.s8.bf16 %v1266
    %v1431 = vunpack.c.h.s8.bf16 %v1267
    %v1432 = vunpack.c.h.s8.bf16 %v1268
    %v1433 = vunpack.c.h.s8.bf16 %v1269
    %v1434 = vunpack.c.l.s8.bf16 %v1270
    %v1435 = vunpack.c.l.s8.bf16 %v1271
    %v1436 = vunpack.c.l.s8.bf16 %v1272
    %v1437 = vunpack.c.l.s8.bf16 %v1273
    %v1438 = vunpack.c.h.s8.bf16 %v1270
    %v1439 = vunpack.c.h.s8.bf16 %v1271
    %v1440 = vunpack.c.h.s8.bf16 %v1272
    %v1441 = vunpack.c.h.s8.bf16 %v1273
    %v1442 = vunpack.c.l.s8.bf16 %v1274
    %v1443 = vunpack.c.l.s8.bf16 %v1275
    %v1444 = vunpack.c.l.s8.bf16 %v1276
    %v1445 = vunpack.c.l.s8.bf16 %v1277
    %v1446 = vunpack.c.h.s8.bf16 %v1274
    %v1447 = vunpack.c.h.s8.bf16 %v1275
    %v1448 = vunpack.c.h.s8.bf16 %v1276
    %v1449 = vunpack.c.h.s8.bf16 %v1277
    %v1450 = vunpack.c.l.s8.bf16 %v1278
    %v1451 = vunpack.c.l.s8.bf16 %v1279
    %v1452 = vunpack.c.l.s8.bf16 %v1280
    %v1453 = vunpack.c.l.s8.bf16 %v1281
    %v1454 = vunpack.c.h.s8.bf16 %v1278
    %v1455 = vunpack.c.h.s8.bf16 %v1279
    %v1456 = vunpack.c.h.s8.bf16 %v1280
    %v1457 = vunpack.c.h.s8.bf16 %v1281
    %v1458 = vunpack.c.l.s8.bf16 %v1282
    %v1459 = vunpack.c.l.s8.bf16 %v1283
    %v1460 = vunpack.c.l.s8.bf16 %v1284
    %v1461 = vunpack.c.l.s8.bf16 %v1285
    %v1462 = vunpack.c.h.s8.bf16 %v1282
    %v1463 = vunpack.c.h.s8.bf16 %v1283
    %v1464 = vunpack.c.h.s8.bf16 %v1284
    %v1465 = vunpack.c.h.s8.bf16 %v1285
    %v1466 = vunpack.c.l.s8.bf16 %v1286
    %v1467 = vunpack.c.l.s8.bf16 %v1287
    %v1468 = vunpack.c.l.s8.bf16 %v1288
    %v1469 = vunpack.c.l.s8.bf16 %v1289
    %v1470 = vunpack.c.h.s8.bf16 %v1286
    %v1471 = vunpack.c.h.s8.bf16 %v1287
    %v1472 = vunpack.c.h.s8.bf16 %v1288
    %v1473 = vunpack.c.h.s8.bf16 %v1289
    %v1474 = vunpack.c.l.s8.bf16 %v1290
    %v1475 = vunpack.c.l.s8.bf16 %v1291
    %v1476 = vunpack.c.l.s8.bf16 %v1292
    %v1477 = vunpack.c.l.s8.bf16 %v1293
    %v1478 = vunpack.c.h.s8.bf16 %v1290
    %v1479 = vunpack.c.h.s8.bf16 %v1291
    %v1480 = vunpack.c.h.s8.bf16 %v1292
    %v1481 = vunpack.c.h.s8.bf16 %v1293
    %v1482 = vunpack.c.l.s8.bf16 %v1294
    %v1483 = vunpack.c.l.s8.bf16 %v1295
    %v1484 = vunpack.c.l.s8.bf16 %v1296
    %v1485 = vunpack.c.l.s8.bf16 %v1297
    %v1486 = vunpack.c.h.s8.bf16 %v1294
    %v1487 = vunpack.c.h.s8.bf16 %v1295
    %v1488 = vunpack.c.h.s8.bf16 %v1296
    %v1489 = vunpack.c.h.s8.bf16 %v1297
    %v1490 = vunpack.c.l.s8.bf16 %v1298
    %v1491 = vunpack.c.l.s8.bf16 %v1299
    %v1492 = vunpack.c.l.s8.bf16 %v1300
    %v1493 = vunpack.c.l.s8.bf16 %v1301
    %v1494 = vunpack.c.h.s8.bf16 %v1298
    %v1495 = vunpack.c.h.s8.bf16 %v1299
    %v1496 = vunpack.c.h.s8.bf16 %v1300
    %v1497 = vunpack.c.h.s8.bf16 %v1301
    %v1498 = vunpack.c.l.s8.bf16 %v1302
    %v1499 = vunpack.c.l.s8.bf16 %v1303
    %v1500 = vunpack.c.l.s8.bf16 %v1304
    %v1501 = vunpack.c.l.s8.bf16 %v1305
    %v1502 = vunpack.c.h.s8.bf16 %v1302
    %v1503 = vunpack.c.h.s8.bf16 %v1303
    %v1504 = vunpack.c.h.s8.bf16 %v1304
    %v1505 = vunpack.c.h.s8.bf16 %v1305
    %v1506 = vunpack.c.l.s8.bf16 %v1306
    %v1507 = vunpack.c.l.s8.bf16 %v1307
    %v1508 = vunpack.c.l.s8.bf16 %v1308
    %v1509 = vunpack.c.l.s8.bf16 %v1309
    %v1510 = vunpack.c.h.s8.bf16 %v1306
    %v1511 = vunpack.c.h.s8.bf16 %v1307
    %v1512 = vunpack.c.h.s8.bf16 %v1308
    %v1513 = vunpack.c.h.s8.bf16 %v1309
    %v1514 = vunpack.c.l.s8.bf16 %v1310
    %v1515 = vunpack.c.l.s8.bf16 %v1311
    %v1516 = vunpack.c.l.s8.bf16 %v1312
    %v1517 = vunpack.c.l.s8.bf16 %v1313
    %v1518 = vunpack.c.h.s8.bf16 %v1310
    %v1519 = vunpack.c.h.s8.bf16 %v1311
    %v1520 = vunpack.c.h.s8.bf16 %v1312
    %v1521 = vunpack.c.h.s8.bf16 %v1313
    %v1522 = vunpack.c.l.s8.bf16 %v1314
    %v1523 = vunpack.c.l.s8.bf16 %v1315
    %v1524 = vunpack.c.l.s8.bf16 %v1316
    %v1525 = vunpack.c.l.s8.bf16 %v1317
    %v1526 = vunpack.c.h.s8.bf16 %v1314
    %v1527 = vunpack.c.h.s8.bf16 %v1315
    %v1528 = vunpack.c.h.s8.bf16 %v1316
    %v1529 = vunpack.c.h.s8.bf16 %v1317
    %v1530 = vunpack.c.l.s8.bf16 %v1318
    %v1531 = vunpack.c.l.s8.bf16 %v1319
    %v1532 = vunpack.c.l.s8.bf16 %v1320
    %v1533 = vunpack.c.l.s8.bf16 %v1321
    %v1534 = vunpack.c.h.s8.bf16 %v1318
    %v1535 = vunpack.c.h.s8.bf16 %v1319
    %v1536 = vunpack.c.h.s8.bf16 %v1320
    %v1537 = vunpack.c.h.s8.bf16 %v1321
    %v1538 = vunpack.c.l.s8.bf16 %v1322
    %v1539 = vunpack.c.l.s8.bf16 %v1323
    %v1540 = vunpack.c.l.s8.bf16 %v1324
    %v1541 = vunpack.c.l.s8.bf16 %v1325
    %v1542 = vunpack.c.h.s8.bf16 %v1322
    %v1543 = vunpack.c.h.s8.bf16 %v1323
    %v1544 = vunpack.c.h.s8.bf16 %v1324
    %v1545 = vunpack.c.h.s8.bf16 %v1325
    %v1546 = vunpack.c.l.s8.bf16 %v1326
    %v1547 = vunpack.c.l.s8.bf16 %v1327
    %v1548 = vunpack.c.l.s8.bf16 %v1328
    %v1549 = vunpack.c.l.s8.bf16 %v1329
    %v1550 = vunpack.c.h.s8.bf16 %v1326
    %v1551 = vunpack.c.h.s8.bf16 %v1327
    %v1552 = vunpack.c.h.s8.bf16 %v1328
    %v1553 = vunpack.c.h.s8.bf16 %v1329
    %v1554 = vunpack.c.l.s8.bf16 %v1330
    %v1555 = vunpack.c.l.s8.bf16 %v1331
    %v1556 = vunpack.c.l.s8.bf16 %v1332
    %v1557 = vunpack.c.l.s8.bf16 %v1333
    %v1558 = vunpack.c.h.s8.bf16 %v1330
    %v1559 = vunpack.c.h.s8.bf16 %v1331
    %v1560 = vunpack.c.h.s8.bf16 %v1332
    %v1561 = vunpack.c.h.s8.bf16 %v1333
    %v1562 = vunpack.c.l.s8.bf16 %v1334
    %v1563 = vunpack.c.l.s8.bf16 %v1335
    %v1564 = vunpack.c.l.s8.bf16 %v1336
    %v1565 = vunpack.c.l.s8.bf16 %v1337
    %v1566 = vunpack.c.h.s8.bf16 %v1334
    %v1567 = vunpack.c.h.s8.bf16 %v1335
    %v1568 = vunpack.c.h.s8.bf16 %v1336
    %v1569 = vunpack.c.h.s8.bf16 %v1337
    %v1570 = vunpack.c.l.s8.bf16 %v1338
    %v1571 = vunpack.c.l.s8.bf16 %v1339
    %v1572 = vunpack.c.l.s8.bf16 %v1340
    %v1573 = vunpack.c.l.s8.bf16 %v1341
    %v1574 = vunpack.c.h.s8.bf16 %v1338
    %v1575 = vunpack.c.h.s8.bf16 %v1339
    %v1576 = vunpack.c.h.s8.bf16 %v1340
    %v1577 = vunpack.c.h.s8.bf16 %v1341
    %v1578 = vunpack.c.l.s8.bf16 %v1342
    %v1579 = vunpack.c.l.s8.bf16 %v1343
    %v1580 = vunpack.c.l.s8.bf16 %v1344
    %v1581 = vunpack.c.l.s8.bf16 %v1345
    %v1582 = vunpack.c.h.s8.bf16 %v1342
    %v1583 = vunpack.c.h.s8.bf16 %v1343
    %v1584 = vunpack.c.h.s8.bf16 %v1344
    %v1585 = vunpack.c.h.s8.bf16 %v1345
    %v1586 = vunpack.c.l.s8.bf16 %v1346
    %v1587 = vunpack.c.l.s8.bf16 %v1347
    %v1588 = vunpack.c.l.s8.bf16 %v1348
    %v1589 = vunpack.c.l.s8.bf16 %v1349
    %v1590 = vunpack.c.h.s8.bf16 %v1346
    %v1591 = vunpack.c.h.s8.bf16 %v1347
    %v1592 = vunpack.c.h.s8.bf16 %v1348
    %v1593 = vunpack.c.h.s8.bf16 %v1349
    %v1594 = vunpack.c.l.s8.bf16 %v1350
    %v1595 = vunpack.c.l.s8.bf16 %v1351
    %v1596 = vunpack.c.l.s8.bf16 %v1352
    %v1597 = vunpack.c.l.s8.bf16 %v1353
    %v1598 = vunpack.c.h.s8.bf16 %v1350
    %v1599 = vunpack.c.h.s8.bf16 %v1351
    %v1600 = vunpack.c.h.s8.bf16 %v1352
    %v1601 = vunpack.c.h.s8.bf16 %v1353
    %v1602 = vunpack.c.l.s8.bf16 %v1354
    %v1603 = vunpack.c.l.s8.bf16 %v1355
    %v1604 = vunpack.c.l.s8.bf16 %v1356
    %v1605 = vunpack.c.l.s8.bf16 %v1357
    %v1606 = vunpack.c.h.s8.bf16 %v1354
    %v1607 = vunpack.c.h.s8.bf16 %v1355
    %v1608 = vunpack.c.h.s8.bf16 %v1356
    %v1609 = vunpack.c.h.s8.bf16 %v1357
    %v1610 = vunpack.c.l.s8.bf16 %v1358
    %v1611 = vunpack.c.l.s8.bf16 %v1359
    %v1612 = vunpack.c.l.s8.bf16 %v1360
    %v1613 = vunpack.c.l.s8.bf16 %v1361
    %v1614 = vunpack.c.h.s8.bf16 %v1358
    %v1615 = vunpack.c.h.s8.bf16 %v1359
    %v1616 = vunpack.c.h.s8.bf16 %v1360
    %v1617 = vunpack.c.h.s8.bf16 %v1361
    %1618 = vmatprep.subr.bf16.mxu0 %v1391
    %1619 = vmatpush1.bf16.msra.mxu0 %v1390
    %1620 = vmatprep.subr.bf16.mxu0 %v1387
    %1621 = vmatpush1.bf16.msra.mxu0 %v1386
    %1622 = vmatprep.subr.bf16.mxu0 %v1383
    %1623 = vmatpush1.bf16.msra.mxu0 %v1382
    %1624 = vmatprep.subr.bf16.mxu0 %v1379
    %1625 = vmatpush1.bf16.msra.mxu0 %v1378
    %1626 = vmatprep.subr.bf16.mxu0 %v1375
    %1627 = vmatpush1.bf16.msra.mxu0 %v1374
    %1628 = vmatprep.subr.bf16.mxu0 %v1371
    %1629 = vmatpush1.bf16.msra.mxu0 %v1370
    %1630 = vmatprep.subr.bf16.mxu0 %v1367
    %1631 = vmatpush1.bf16.msra.mxu0 %v1366
    %1632 = vmatprep.subr.bf16.mxu0 %v1363
    %1633 = vmatpush1.bf16.msra.mxu0 %v1362
    %1634 = vmatprep.subr.bf16.mxu0 %v1423
    %1635 = vmatpush2.bf16.msra.mxu0 %v1422
    %1636 = vmatprep.subr.bf16.mxu0 %v1419
    %1637 = vmatpush2.bf16.msra.mxu0 %v1418
    %1638 = vmatprep.subr.bf16.mxu0 %v1415
    %1639 = vmatpush2.bf16.msra.mxu0 %v1414
    %1640 = vmatprep.subr.bf16.mxu0 %v1411
    %1641 = vmatpush2.bf16.msra.mxu0 %v1410
    %1642 = vmatprep.subr.bf16.mxu0 %v1407
    %1643 = vmatpush2.bf16.msra.mxu0 %v1406
    %1644 = vmatprep.subr.bf16.mxu0 %v1403
    %1645 = vmatpush2.bf16.msra.mxu0 %v1402
    %1646 = vmatprep.subr.bf16.mxu0 %v1399
    %1647 = vmatpush2.bf16.msra.mxu0 %v1398
    %1648 = vmatprep.subr.bf16.mxu0 %v1395
    %1649 = vmatpush2.bf16.msra.mxu0 %v1394
    %1650 = vmatprep.mubr.bf16.mxu0 %v1227
    %1651 = vmatmul.mubr.bf16.gmra.mxu0 %v1226
    %v1652 = vpop.f32.mrf.mxu0
    %v1653 = vadd.f32 0.0, %v1652
    %v1654 = vpop.f32.mrf.mxu0
    %v1655 = vadd.f32 0.0, %v1654
    %v1656 = vpop.f32.mrf.mxu0
    %v1657 = vadd.f32 0.0, %v1656
    %v1658 = vpop.f32.mrf.mxu0
    %v1659 = vadd.f32 0.0, %v1658
    %1660 = vdwg.mxu0
    %1661 = vmatprep.subr.bf16.mxu0 %v1455
    %1662 = vmatpush1.bf16.msra.mxu0 %v1454
    %1663 = vmatprep.subr.bf16.mxu0 %v1451
    %1664 = vmatpush1.bf16.msra.mxu0 %v1450
    %1665 = vmatprep.subr.bf16.mxu0 %v1447
    %1666 = vmatpush1.bf16.msra.mxu0 %v1446
    %1667 = vmatprep.subr.bf16.mxu0 %v1443
    %1668 = vmatpush1.bf16.msra.mxu0 %v1442
    %1669 = vmatprep.subr.bf16.mxu0 %v1439
    %1670 = vmatpush1.bf16.msra.mxu0 %v1438
    %1671 = vmatprep.subr.bf16.mxu0 %v1435
    %1672 = vmatpush1.bf16.msra.mxu0 %v1434
    %1673 = vmatprep.subr.bf16.mxu0 %v1431
    %1674 = vmatpush1.bf16.msra.mxu0 %v1430
    %1675 = vmatprep.subr.bf16.mxu0 %v1427
    %1676 = vmatpush1.bf16.msra.mxu0 %v1426
    %1677 = vmatprep.subr.bf16.mxu0 %v1487
    %1678 = vmatpush2.bf16.msra.mxu0 %v1486
    %1679 = vmatprep.subr.bf16.mxu0 %v1483
    %1680 = vmatpush2.bf16.msra.mxu0 %v1482
    %1681 = vmatprep.subr.bf16.mxu0 %v1479
    %1682 = vmatpush2.bf16.msra.mxu0 %v1478
    %1683 = vmatprep.subr.bf16.mxu0 %v1475
    %1684 = vmatpush2.bf16.msra.mxu0 %v1474
    %1685 = vmatprep.subr.bf16.mxu0 %v1471
    %1686 = vmatpush2.bf16.msra.mxu0 %v1470
    %1687 = vmatprep.subr.bf16.mxu0 %v1467
    %1688 = vmatpush2.bf16.msra.mxu0 %v1466
    %1689 = vmatprep.subr.bf16.mxu0 %v1463
    %1690 = vmatpush2.bf16.msra.mxu0 %v1462
    %1691 = vmatprep.subr.bf16.mxu0 %v1459
    %1692 = vmatpush2.bf16.msra.mxu0 %v1458
    %1693 = vmatprep.mubr.bf16.mxu0 %v1229
    %1694 = vmatmul.mubr.bf16.gmra.mxu0 %v1228
    %v1695 = vpop.f32.mrf.mxu0
    %v1696 = vadd.f32 %v1653, %v1695
    %v1697 = vpop.f32.mrf.mxu0
    %v1698 = vadd.f32 %v1655, %v1697
    %v1699 = vpop.f32.mrf.mxu0
    %v1700 = vadd.f32 %v1657, %v1699
    %v1701 = vpop.f32.mrf.mxu0
    %v1702 = vadd.f32 %v1659, %v1701
    %1703 = vdwg.mxu0
    %1704 = vmatprep.subr.bf16.mxu0 %v1519
    %1705 = vmatpush1.bf16.msra.mxu0 %v1518
    %1706 = vmatprep.subr.bf16.mxu0 %v1515
    %1707 = vmatpush1.bf16.msra.mxu0 %v1514
    %1708 = vmatprep.subr.bf16.mxu0 %v1511
    %1709 = vmatpush1.bf16.msra.mxu0 %v1510
    %1710 = vmatprep.subr.bf16.mxu0 %v1507
    %1711 = vmatpush1.bf16.msra.mxu0 %v1506
    %1712 = vmatprep.subr.bf16.mxu0 %v1503
    %1713 = vmatpush1.bf16.msra.mxu0 %v1502
    %1714 = vmatprep.subr.bf16.mxu0 %v1499
    %1715 = vmatpush1.bf16.msra.mxu0 %v1498
    %1716 = vmatprep.subr.bf16.mxu0 %v1495
    %1717 = vmatpush1.bf16.msra.mxu0 %v1494
    %1718 = vmatprep.subr.bf16.mxu0 %v1491
    %1719 = vmatpush1.bf16.msra.mxu0 %v1490
    %1720 = vmatprep.subr.bf16.mxu0 %v1551
    %1721 = vmatpush2.bf16.msra.mxu0 %v1550
    %1722 = vmatprep.subr.bf16.mxu0 %v1547
    %1723 = vmatpush2.bf16.msra.mxu0 %v1546
    %1724 = vmatprep.subr.bf16.mxu0 %v1543
    %1725 = vmatpush2.bf16.msra.mxu0 %v1542
    %1726 = vmatprep.subr.bf16.mxu0 %v1539
    %1727 = vmatpush2.bf16.msra.mxu0 %v1538
    %1728 = vmatprep.subr.bf16.mxu0 %v1535
    %1729 = vmatpush2.bf16.msra.mxu0 %v1534
    %1730 = vmatprep.subr.bf16.mxu0 %v1531
    %1731 = vmatpush2.bf16.msra.mxu0 %v1530
    %1732 = vmatprep.subr.bf16.mxu0 %v1527
    %1733 = vmatpush2.bf16.msra.mxu0 %v1526
    %1734 = vmatprep.subr.bf16.mxu0 %v1523
    %1735 = vmatpush2.bf16.msra.mxu0 %v1522
    %1736 = vmatprep.mubr.bf16.mxu0 %v1231
    %1737 = vmatmul.mubr.bf16.gmra.mxu0 %v1230
    %v1738 = vpop.f32.mrf.mxu0
    %v1739 = vadd.f32 %v1696, %v1738
    %v1740 = vpop.f32.mrf.mxu0
    %v1741 = vadd.f32 %v1698, %v1740
    %v1742 = vpop.f32.mrf.mxu0
    %v1743 = vadd.f32 %v1700, %v1742
    %v1744 = vpop.f32.mrf.mxu0
    %v1745 = vadd.f32 %v1702, %v1744
    %1746 = vdwg.mxu0
    %1747 = vmatprep.subr.bf16.mxu0 %v1583
    %1748 = vmatpush1.bf16.msra.mxu0 %v1582
    %1749 = vmatprep.subr.bf16.mxu0 %v1579
    %1750 = vmatpush1.bf16.msra.mxu0 %v1578
    %1751 = vmatprep.subr.bf16.mxu0 %v1575
    %1752 = vmatpush1.bf16.msra.mxu0 %v1574
    %1753 = vmatprep.subr.bf16.mxu0 %v1571
    %1754 = vmatpush1.bf16.msra.mxu0 %v1570
    %1755 = vmatprep.subr.bf16.mxu0 %v1567
    %1756 = vmatpush1.bf16.msra.mxu0 %v1566
    %1757 = vmatprep.subr.bf16.mxu0 %v1563
    %1758 = vmatpush1.bf16.msra.mxu0 %v1562
    %1759 = vmatprep.subr.bf16.mxu0 %v1559
    %1760 = vmatpush1.bf16.msra.mxu0 %v1558
    %1761 = vmatprep.subr.bf16.mxu0 %v1555
    %1762 = vmatpush1.bf16.msra.mxu0 %v1554
    %1763 = vmatprep.subr.bf16.mxu0 %v1615
    %1764 = vmatpush2.bf16.msra.mxu0 %v1614
    %1765 = vmatprep.subr.bf16.mxu0 %v1611
    %1766 = vmatpush2.bf16.msra.mxu0 %v1610
    %1767 = vmatprep.subr.bf16.mxu0 %v1607
    %1768 = vmatpush2.bf16.msra.mxu0 %v1606
    %1769 = vmatprep.subr.bf16.mxu0 %v1603
    %1770 = vmatpush2.bf16.msra.mxu0 %v1602
    %1771 = vmatprep.subr.bf16.mxu0 %v1599
    %1772 = vmatpush2.bf16.msra.mxu0 %v1598
    %1773 = vmatprep.subr.bf16.mxu0 %v1595
    %1774 = vmatpush2.bf16.msra.mxu0 %v1594
    %1775 = vmatprep.subr.bf16.mxu0 %v1591
    %1776 = vmatpush2.bf16.msra.mxu0 %v1590
    %1777 = vmatprep.subr.bf16.mxu0 %v1587
    %1778 = vmatpush2.bf16.msra.mxu0 %v1586
    %1779 = vmatprep.mubr.bf16.mxu0 %v1233
    %1780 = vmatmul.mubr.bf16.gmra.mxu0 %v1232
    %v1781 = vpop.f32.mrf.mxu0
    %v1782 = vadd.f32 %v1739, %v1781
    %v1783 = vpop.f32.mrf.mxu0
    %v1784 = vadd.f32 %v1741, %v1783
    %v1785 = vpop.f32.mrf.mxu0
    %v1786 = vadd.f32 %v1743, %v1785
    %v1787 = vpop.f32.mrf.mxu0
    %v1788 = vadd.f32 %v1745, %v1787
    %1789 = vdwg.mxu0
    %1790 = vmatprep.subr.bf16.mxu0 %v1393
    %1791 = vmatpush1.bf16.msra.mxu0 %v1392
    %1792 = vmatprep.subr.bf16.mxu0 %v1389
    %1793 = vmatpush1.bf16.msra.mxu0 %v1388
    %1794 = vmatprep.subr.bf16.mxu0 %v1385
    %1795 = vmatpush1.bf16.msra.mxu0 %v1384
    %1796 = vmatprep.subr.bf16.mxu0 %v1381
    %1797 = vmatpush1.bf16.msra.mxu0 %v1380
    %1798 = vmatprep.subr.bf16.mxu0 %v1377
    %1799 = vmatpush1.bf16.msra.mxu0 %v1376
    %1800 = vmatprep.subr.bf16.mxu0 %v1373
    %1801 = vmatpush1.bf16.msra.mxu0 %v1372
    %1802 = vmatprep.subr.bf16.mxu0 %v1369
    %1803 = vmatpush1.bf16.msra.mxu0 %v1368
    %1804 = vmatprep.subr.bf16.mxu0 %v1365
    %1805 = vmatpush1.bf16.msra.mxu0 %v1364
    %1806 = vmatprep.subr.bf16.mxu0 %v1425
    %1807 = vmatpush2.bf16.msra.mxu0 %v1424
    %1808 = vmatprep.subr.bf16.mxu0 %v1421
    %1809 = vmatpush2.bf16.msra.mxu0 %v1420
    %1810 = vmatprep.subr.bf16.mxu0 %v1417
    %1811 = vmatpush2.bf16.msra.mxu0 %v1416
    %1812 = vmatprep.subr.bf16.mxu0 %v1413
    %1813 = vmatpush2.bf16.msra.mxu0 %v1412
    %1814 = vmatprep.subr.bf16.mxu0 %v1409
    %1815 = vmatpush2.bf16.msra.mxu0 %v1408
    %1816 = vmatprep.subr.bf16.mxu0 %v1405
    %1817 = vmatpush2.bf16.msra.mxu0 %v1404
    %1818 = vmatprep.subr.bf16.mxu0 %v1401
    %1819 = vmatpush2.bf16.msra.mxu0 %v1400
    %1820 = vmatprep.subr.bf16.mxu0 %v1397
    %1821 = vmatpush2.bf16.msra.mxu0 %v1396
    %1822 = vmatprep.mubr.bf16.mxu0 %v1227
    %1823 = vmatmul.mubr.bf16.gmra.mxu0 %v1226
    %v1824 = vpop.f32.mrf.mxu0
    %v1825 = vadd.f32 0.0, %v1824
    %v1826 = vpop.f32.mrf.mxu0
    %v1827 = vadd.f32 0.0, %v1826
    %v1828 = vpop.f32.mrf.mxu0
    %v1829 = vadd.f32 0.0, %v1828
    %v1830 = vpop.f32.mrf.mxu0
    %v1831 = vadd.f32 0.0, %v1830
    %1832 = vdwg.mxu0
    %1833 = vmatprep.subr.bf16.mxu0 %v1457
    %1834 = vmatpush1.bf16.msra.mxu0 %v1456
    %1835 = vmatprep.subr.bf16.mxu0 %v1453
    %1836 = vmatpush1.bf16.msra.mxu0 %v1452
    %1837 = vmatprep.subr.bf16.mxu0 %v1449
    %1838 = vmatpush1.bf16.msra.mxu0 %v1448
    %1839 = vmatprep.subr.bf16.mxu0 %v1445
    %1840 = vmatpush1.bf16.msra.mxu0 %v1444
    %1841 = vmatprep.subr.bf16.mxu0 %v1441
    %1842 = vmatpush1.bf16.msra.mxu0 %v1440
    %1843 = vmatprep.subr.bf16.mxu0 %v1437
    %1844 = vmatpush1.bf16.msra.mxu0 %v1436
    %1845 = vmatprep.subr.bf16.mxu0 %v1433
    %1846 = vmatpush1.bf16.msra.mxu0 %v1432
    %1847 = vmatprep.subr.bf16.mxu0 %v1429
    %1848 = vmatpush1.bf16.msra.mxu0 %v1428
    %1849 = vmatprep.subr.bf16.mxu0 %v1489
    %1850 = vmatpush2.bf16.msra.mxu0 %v1488
    %1851 = vmatprep.subr.bf16.mxu0 %v1485
    %1852 = vmatpush2.bf16.msra.mxu0 %v1484
    %1853 = vmatprep.subr.bf16.mxu0 %v1481
    %1854 = vmatpush2.bf16.msra.mxu0 %v1480
    %1855 = vmatprep.subr.bf16.mxu0 %v1477
    %1856 = vmatpush2.bf16.msra.mxu0 %v1476
    %1857 = vmatprep.subr.bf16.mxu0 %v1473
    %1858 = vmatpush2.bf16.msra.mxu0 %v1472
    %1859 = vmatprep.subr.bf16.mxu0 %v1469
    %1860 = vmatpush2.bf16.msra.mxu0 %v1468
    %1861 = vmatprep.subr.bf16.mxu0 %v1465
    %1862 = vmatpush2.bf16.msra.mxu0 %v1464
    %1863 = vmatprep.subr.bf16.mxu0 %v1461
    %1864 = vmatpush2.bf16.msra.mxu0 %v1460
    %1865 = vmatprep.mubr.bf16.mxu0 %v1229
    %1866 = vmatmul.mubr.bf16.gmra.mxu0 %v1228
    %v1867 = vpop.f32.mrf.mxu0
    %v1868 = vadd.f32 %v1825, %v1867
    %v1869 = vpop.f32.mrf.mxu0
    %v1870 = vadd.f32 %v1827, %v1869
    %v1871 = vpop.f32.mrf.mxu0
    %v1872 = vadd.f32 %v1829, %v1871
    %v1873 = vpop.f32.mrf.mxu0
    %v1874 = vadd.f32 %v1831, %v1873
    %1875 = vdwg.mxu0
    %1876 = vmatprep.subr.bf16.mxu0 %v1521
    %1877 = vmatpush1.bf16.msra.mxu0 %v1520
    %1878 = vmatprep.subr.bf16.mxu0 %v1517
    %1879 = vmatpush1.bf16.msra.mxu0 %v1516
    %1880 = vmatprep.subr.bf16.mxu0 %v1513
    %1881 = vmatpush1.bf16.msra.mxu0 %v1512
    %1882 = vmatprep.subr.bf16.mxu0 %v1509
    %1883 = vmatpush1.bf16.msra.mxu0 %v1508
    %1884 = vmatprep.subr.bf16.mxu0 %v1505
    %1885 = vmatpush1.bf16.msra.mxu0 %v1504
    %1886 = vmatprep.subr.bf16.mxu0 %v1501
    %1887 = vmatpush1.bf16.msra.mxu0 %v1500
    %1888 = vmatprep.subr.bf16.mxu0 %v1497
    %1889 = vmatpush1.bf16.msra.mxu0 %v1496
    %1890 = vmatprep.subr.bf16.mxu0 %v1493
    %1891 = vmatpush1.bf16.msra.mxu0 %v1492
    %1892 = vmatprep.subr.bf16.mxu0 %v1553
    %1893 = vmatpush2.bf16.msra.mxu0 %v1552
    %1894 = vmatprep.subr.bf16.mxu0 %v1549
    %1895 = vmatpush2.bf16.msra.mxu0 %v1548
    %1896 = vmatprep.subr.bf16.mxu0 %v1545
    %1897 = vmatpush2.bf16.msra.mxu0 %v1544
    %1898 = vmatprep.subr.bf16.mxu0 %v1541
    %1899 = vmatpush2.bf16.msra.mxu0 %v1540
    %1900 = vmatprep.subr.bf16.mxu0 %v1537
    %1901 = vmatpush2.bf16.msra.mxu0 %v1536
    %1902 = vmatprep.subr.bf16.mxu0 %v1533
    %1903 = vmatpush2.bf16.msra.mxu0 %v1532
    %1904 = vmatprep.subr.bf16.mxu0 %v1529
    %1905 = vmatpush2.bf16.msra.mxu0 %v1528
    %1906 = vmatprep.subr.bf16.mxu0 %v1525
    %1907 = vmatpush2.bf16.msra.mxu0 %v1524
    %1908 = vmatprep.mubr.bf16.mxu0 %v1231
    %1909 = vmatmul.mubr.bf16.gmra.mxu0 %v1230
    %v1910 = vpop.f32.mrf.mxu0
    %v1911 = vadd.f32 %v1868, %v1910
    %v1912 = vpop.f32.mrf.mxu0
    %v1913 = vadd.f32 %v1870, %v1912
    %v1914 = vpop.f32.mrf.mxu0
    %v1915 = vadd.f32 %v1872, %v1914
    %v1916 = vpop.f32.mrf.mxu0
    %v1917 = vadd.f32 %v1874, %v1916
    %1918 = vdwg.mxu0
    %1919 = vmatprep.subr.bf16.mxu0 %v1585
    %1920 = vmatpush1.bf16.msra.mxu0 %v1584
    %1921 = vmatprep.subr.bf16.mxu0 %v1581
    %1922 = vmatpush1.bf16.msra.mxu0 %v1580
    %1923 = vmatprep.subr.bf16.mxu0 %v1577
    %1924 = vmatpush1.bf16.msra.mxu0 %v1576
    %1925 = vmatprep.subr.bf16.mxu0 %v1573
    %1926 = vmatpush1.bf16.msra.mxu0 %v1572
    %1927 = vmatprep.subr.bf16.mxu0 %v1569
    %1928 = vmatpush1.bf16.msra.mxu0 %v1568
    %1929 = vmatprep.subr.bf16.mxu0 %v1565
    %1930 = vmatpush1.bf16.msra.mxu0 %v1564
    %1931 = vmatprep.subr.bf16.mxu0 %v1561
    %1932 = vmatpush1.bf16.msra.mxu0 %v1560
    %1933 = vmatprep.subr.bf16.mxu0 %v1557
    %1934 = vmatpush1.bf16.msra.mxu0 %v1556
    %1935 = vmatprep.subr.bf16.mxu0 %v1617
    %1936 = vmatpush2.bf16.msra.mxu0 %v1616
    %1937 = vmatprep.subr.bf16.mxu0 %v1613
    %1938 = vmatpush2.bf16.msra.mxu0 %v1612
    %1939 = vmatprep.subr.bf16.mxu0 %v1609
    %1940 = vmatpush2.bf16.msra.mxu0 %v1608
    %1941 = vmatprep.subr.bf16.mxu0 %v1605
    %1942 = vmatpush2.bf16.msra.mxu0 %v1604
    %1943 = vmatprep.subr.bf16.mxu0 %v1601
    %1944 = vmatpush2.bf16.msra.mxu0 %v1600
    %1945 = vmatprep.subr.bf16.mxu0 %v1597
    %1946 = vmatpush2.bf16.msra.mxu0 %v1596
    %1947 = vmatprep.subr.bf16.mxu0 %v1593
    %1948 = vmatpush2.bf16.msra.mxu0 %v1592
    %1949 = vmatprep.subr.bf16.mxu0 %v1589
    %1950 = vmatpush2.bf16.msra.mxu0 %v1588
    %1951 = vmatprep.mubr.bf16.mxu0 %v1233
    %1952 = vmatmul.mubr.bf16.gmra.mxu0 %v1232
    %v1953 = vpop.f32.mrf.mxu0
    %v1954 = vadd.f32 %v1911, %v1953
    %v1955 = vpop.f32.mrf.mxu0
    %v1956 = vadd.f32 %v1913, %v1955
    %v1957 = vpop.f32.mrf.mxu0
    %v1958 = vadd.f32 %v1915, %v1957
    %v1959 = vpop.f32.mrf.mxu0
    %v1960 = vadd.f32 %v1917, %v1959
    %1961 = vdwg.mxu0
    %v1962 = vld [vmem:[#allocation9] sm:$0xf]
    %v1964 = vlaneseq
    %v1965 = vshrl.u32 %v1964, 7
    %v1966 = vsub.s32 0, %v1965
    %v1967 = vrot.slane %v1962, %v1966
    %v1968 = vlaneseq
    %v1969 = vshrl.u32 %v1968, 7
    %v1970 = vsub.s32 1, %v1969
    %v1971 = vrot.slane %v1962, %v1970
    %v1972 = vlaneseq
    %v1973 = vshrl.u32 %v1972, 7
    %v1974 = vsub.s32 2, %v1973
    %v1975 = vrot.slane %v1962, %v1974
    %v1976 = vlaneseq
    %v1977 = vshrl.u32 %v1976, 7
    %v1978 = vsub.s32 3, %v1977
    %v1979 = vrot.slane %v1962, %v1978
    %v1984 = vmul.f32 %v1782, %v1967
    %v1985 = vmul.f32 %v1784, %v1971
    %v1986 = vmul.f32 %v1954, %v1975
    %v1987 = vmul.f32 %v1956, %v1979
    %v1988 = vmul.f32 %v1786, %v1967
    %v1989 = vmul.f32 %v1788, %v1971
    %v1990 = vmul.f32 %v1958, %v1975
    %v1991 = vmul.f32 %v1960, %v1979
    %v1992 = vld [vmem:[#allocation10] sm:$0xf]
    %v1994 = vlaneseq
    %v1995 = vshrl.u32 %v1994, 7
    %v1996 = vsub.s32 0, %v1995
    %v1997 = vrot.slane %v1992, %v1996
    %v1998 = vlaneseq
    %v1999 = vshrl.u32 %v1998, 7
    %v2000 = vsub.s32 1, %v1999
    %v2001 = vrot.slane %v1992, %v2000
    %v2002 = vlaneseq
    %v2003 = vshrl.u32 %v2002, 7
    %v2004 = vsub.s32 2, %v2003
    %v2005 = vrot.slane %v1992, %v2004
    %v2006 = vlaneseq
    %v2007 = vshrl.u32 %v2006, 7
    %v2008 = vsub.s32 3, %v2007
    %v2009 = vrot.slane %v1992, %v2008
    %v2014 = vadd.f32 %v1984, %v1997
    %v2015 = vadd.f32 %v1985, %v2001
    %v2016 = vadd.f32 %v1986, %v2005
    %v2017 = vadd.f32 %v1987, %v2009
    %v2018 = vadd.f32 %v1988, %v1997
    %v2019 = vadd.f32 %v1989, %v2001
    %v2020 = vadd.f32 %v1990, %v2005
    %v2021 = vadd.f32 %v1991, %v2009
    %v2022 = vmax.f32 %v2014, 0.0
    %v2023 = vmax.f32 %v2015, 0.0
    %v2024 = vmax.f32 %v2016, 0.0
    %v2025 = vmax.f32 %v2017, 0.0
    %v2026 = vmax.f32 %v2018, 0.0
    %v2027 = vmax.f32 %v2019, 0.0
    %v2028 = vmax.f32 %v2020, 0.0
    %v2029 = vmax.f32 %v2021, 0.0
    %v2030 = vpack.c.bf16 %v2026, %v2022
    %v2031 = vpack.c.bf16 %v2027, %v2023
    %v2032 = vpack.c.bf16 %v2028, %v2024
    %v2033 = vpack.c.bf16 %v2029, %v2025
    %v2034 = vld [vmem:[#allocation12] sm:$0xff]
    %v2035 = vld [vmem:[#allocation12 + $0x8] sm:$0xff]
    %v2036 = vld [vmem:[#allocation12 + $0x10] sm:$0xff]
    %v2037 = vld [vmem:[#allocation12 + $0x18] sm:$0xff]
    %v2038 = vld [vmem:[#allocation12 + $0x20] sm:$0xff]
    %v2039 = vld [vmem:[#allocation12 + $0x28] sm:$0xff]
    %v2040 = vld [vmem:[#allocation12 + $0x30] sm:$0xff]
    %v2041 = vld [vmem:[#allocation12 + $0x38] sm:$0xff]
    %v2042 = vld [vmem:[#allocation12 + $0x40] sm:$0xff]
    %v2043 = vld [vmem:[#allocation12 + $0x48] sm:$0xff]
    %v2044 = vld [vmem:[#allocation12 + $0x50] sm:$0xff]
    %v2045 = vld [vmem:[#allocation12 + $0x58] sm:$0xff]
    %v2046 = vld [vmem:[#allocation12 + $0x60] sm:$0xff]
    %v2047 = vld [vmem:[#allocation12 + $0x68] sm:$0xff]
    %v2048 = vld [vmem:[#allocation12 + $0x70] sm:$0xff]
    %v2049 = vld [vmem:[#allocation12 + $0x78] sm:$0xff]
    %v2050 = vld [vmem:[#allocation12 + $0x80] sm:$0xff]
    %v2051 = vld [vmem:[#allocation12 + $0x88] sm:$0xff]
    %v2052 = vld [vmem:[#allocation12 + $0x90] sm:$0xff]
    %v2053 = vld [vmem:[#allocation12 + $0x98] sm:$0xff]
    %v2054 = vld [vmem:[#allocation12 + $0xa0] sm:$0xff]
    %v2055 = vld [vmem:[#allocation12 + $0xa8] sm:$0xff]
    %v2056 = vld [vmem:[#allocation12 + $0xb0] sm:$0xff]
    %v2057 = vld [vmem:[#allocation12 + $0xb8] sm:$0xff]
    %v2058 = vld [vmem:[#allocation12 + $0xc0] sm:$0xff]
    %v2059 = vld [vmem:[#allocation12 + $0xc8] sm:$0xff]
    %v2060 = vld [vmem:[#allocation12 + $0xd0] sm:$0xff]
    %v2061 = vld [vmem:[#allocation12 + $0xd8] sm:$0xff]
    %v2062 = vld [vmem:[#allocation12 + $0xe0] sm:$0xff]
    %v2063 = vld [vmem:[#allocation12 + $0xe8] sm:$0xff]
    %v2064 = vld [vmem:[#allocation12 + $0xf0] sm:$0xff]
    %v2065 = vld [vmem:[#allocation12 + $0xf8] sm:$0xff]
    %v2066 = vunpack.c.l.s8.bf16 %v2034
    %v2067 = vunpack.c.l.s8.bf16 %v2035
    %v2068 = vunpack.c.h.s8.bf16 %v2034
    %v2069 = vunpack.c.h.s8.bf16 %v2035
    %v2070 = vunpack.c.l.s8.bf16 %v2036
    %v2071 = vunpack.c.l.s8.bf16 %v2037
    %v2072 = vunpack.c.h.s8.bf16 %v2036
    %v2073 = vunpack.c.h.s8.bf16 %v2037
    %v2074 = vunpack.c.l.s8.bf16 %v2038
    %v2075 = vunpack.c.l.s8.bf16 %v2039
    %v2076 = vunpack.c.h.s8.bf16 %v2038
    %v2077 = vunpack.c.h.s8.bf16 %v2039
    %v2078 = vunpack.c.l.s8.bf16 %v2040
    %v2079 = vunpack.c.l.s8.bf16 %v2041
    %v2080 = vunpack.c.h.s8.bf16 %v2040
    %v2081 = vunpack.c.h.s8.bf16 %v2041
    %v2082 = vunpack.c.l.s8.bf16 %v2042
    %v2083 = vunpack.c.l.s8.bf16 %v2043
    %v2084 = vunpack.c.h.s8.bf16 %v2042
    %v2085 = vunpack.c.h.s8.bf16 %v2043
    %v2086 = vunpack.c.l.s8.bf16 %v2044
    %v2087 = vunpack.c.l.s8.bf16 %v2045
    %v2088 = vunpack.c.h.s8.bf16 %v2044
    %v2089 = vunpack.c.h.s8.bf16 %v2045
    %v2090 = vunpack.c.l.s8.bf16 %v2046
    %v2091 = vunpack.c.l.s8.bf16 %v2047
    %v2092 = vunpack.c.h.s8.bf16 %v2046
    %v2093 = vunpack.c.h.s8.bf16 %v2047
    %v2094 = vunpack.c.l.s8.bf16 %v2048
    %v2095 = vunpack.c.l.s8.bf16 %v2049
    %v2096 = vunpack.c.h.s8.bf16 %v2048
    %v2097 = vunpack.c.h.s8.bf16 %v2049
    %v2098 = vunpack.c.l.s8.bf16 %v2050
    %v2099 = vunpack.c.l.s8.bf16 %v2051
    %v2100 = vunpack.c.h.s8.bf16 %v2050
    %v2101 = vunpack.c.h.s8.bf16 %v2051
    %v2102 = vunpack.c.l.s8.bf16 %v2052
    %v2103 = vunpack.c.l.s8.bf16 %v2053
    %v2104 = vunpack.c.h.s8.bf16 %v2052
    %v2105 = vunpack.c.h.s8.bf16 %v2053
    %v2106 = vunpack.c.l.s8.bf16 %v2054
    %v2107 = vunpack.c.l.s8.bf16 %v2055
    %v2108 = vunpack.c.h.s8.bf16 %v2054
    %v2109 = vunpack.c.h.s8.bf16 %v2055
    %v2110 = vunpack.c.l.s8.bf16 %v2056
    %v2111 = vunpack.c.l.s8.bf16 %v2057
    %v2112 = vunpack.c.h.s8.bf16 %v2056
    %v2113 = vunpack.c.h.s8.bf16 %v2057
    %v2114 = vunpack.c.l.s8.bf16 %v2058
    %v2115 = vunpack.c.l.s8.bf16 %v2059
    %v2116 = vunpack.c.h.s8.bf16 %v2058
    %v2117 = vunpack.c.h.s8.bf16 %v2059
    %v2118 = vunpack.c.l.s8.bf16 %v2060
    %v2119 = vunpack.c.l.s8.bf16 %v2061
    %v2120 = vunpack.c.h.s8.bf16 %v2060
    %v2121 = vunpack.c.h.s8.bf16 %v2061
    %v2122 = vunpack.c.l.s8.bf16 %v2062
    %v2123 = vunpack.c.l.s8.bf16 %v2063
    %v2124 = vunpack.c.h.s8.bf16 %v2062
    %v2125 = vunpack.c.h.s8.bf16 %v2063
    %v2126 = vunpack.c.l.s8.bf16 %v2064
    %v2127 = vunpack.c.l.s8.bf16 %v2065
    %v2128 = vunpack.c.h.s8.bf16 %v2064
    %v2129 = vunpack.c.h.s8.bf16 %v2065
    %2130 = vmatprep.subr.bf16.mxu0 %v2081
    %2131 = vmatpush1.bf16.msra.mxu0 %v2080
    %2132 = vmatprep.subr.bf16.mxu0 %v2079
    %2133 = vmatpush1.bf16.msra.mxu0 %v2078
    %2134 = vmatprep.subr.bf16.mxu0 %v2077
    %2135 = vmatpush1.bf16.msra.mxu0 %v2076
    %2136 = vmatprep.subr.bf16.mxu0 %v2075
    %2137 = vmatpush1.bf16.msra.mxu0 %v2074
    %2138 = vmatprep.subr.bf16.mxu0 %v2073
    %2139 = vmatpush1.bf16.msra.mxu0 %v2072
    %2140 = vmatprep.subr.bf16.mxu0 %v2071
    %2141 = vmatpush1.bf16.msra.mxu0 %v2070
    %2142 = vmatprep.subr.bf16.mxu0 %v2069
    %2143 = vmatpush1.bf16.msra.mxu0 %v2068
    %2144 = vmatprep.subr.bf16.mxu0 %v2067
    %2145 = vmatpush1.bf16.msra.mxu0 %v2066
    %2146 = vmatprep.subr.bf16.mxu0 %v2097
    %2147 = vmatpush2.bf16.msra.mxu0 %v2096
    %2148 = vmatprep.subr.bf16.mxu0 %v2095
    %2149 = vmatpush2.bf16.msra.mxu0 %v2094
    %2150 = vmatprep.subr.bf16.mxu0 %v2093
    %2151 = vmatpush2.bf16.msra.mxu0 %v2092
    %2152 = vmatprep.subr.bf16.mxu0 %v2091
    %2153 = vmatpush2.bf16.msra.mxu0 %v2090
    %2154 = vmatprep.subr.bf16.mxu0 %v2089
    %2155 = vmatpush2.bf16.msra.mxu0 %v2088
    %2156 = vmatprep.subr.bf16.mxu0 %v2087
    %2157 = vmatpush2.bf16.msra.mxu0 %v2086
    %2158 = vmatprep.subr.bf16.mxu0 %v2085
    %2159 = vmatpush2.bf16.msra.mxu0 %v2084
    %2160 = vmatprep.subr.bf16.mxu0 %v2083
    %2161 = vmatpush2.bf16.msra.mxu0 %v2082
    %2162 = vmatprep.mubr.bf16.mxu0 %v2031
    %2163 = vmatmul.mubr.bf16.gmra.mxu0 %v2030
    %v2164 = vpop.f32.mrf.mxu0
    %v2165 = vadd.f32 0.0, %v2164
    %v2166 = vpop.f32.mrf.mxu0
    %v2167 = vadd.f32 0.0, %v2166
    %v2168 = vpop.f32.mrf.mxu0
    %v2169 = vadd.f32 0.0, %v2168
    %v2170 = vpop.f32.mrf.mxu0
    %v2171 = vadd.f32 0.0, %v2170
    %2172 = vdwg.mxu0
    %2173 = vmatprep.subr.bf16.mxu0 %v2113
    %2174 = vmatpush1.bf16.msra.mxu0 %v2112
    %2175 = vmatprep.subr.bf16.mxu0 %v2111
    %2176 = vmatpush1.bf16.msra.mxu0 %v2110
    %2177 = vmatprep.subr.bf16.mxu0 %v2109
    %2178 = vmatpush1.bf16.msra.mxu0 %v2108
    %2179 = vmatprep.subr.bf16.mxu0 %v2107
    %2180 = vmatpush1.bf16.msra.mxu0 %v2106
    %2181 = vmatprep.subr.bf16.mxu0 %v2105
    %2182 = vmatpush1.bf16.msra.mxu0 %v2104
    %2183 = vmatprep.subr.bf16.mxu0 %v2103
    %2184 = vmatpush1.bf16.msra.mxu0 %v2102
    %2185 = vmatprep.subr.bf16.mxu0 %v2101
    %2186 = vmatpush1.bf16.msra.mxu0 %v2100
    %2187 = vmatprep.subr.bf16.mxu0 %v2099
    %2188 = vmatpush1.bf16.msra.mxu0 %v2098
    %2189 = vmatprep.subr.bf16.mxu0 %v2129
    %2190 = vmatpush2.bf16.msra.mxu0 %v2128
    %2191 = vmatprep.subr.bf16.mxu0 %v2127
    %2192 = vmatpush2.bf16.msra.mxu0 %v2126
    %2193 = vmatprep.subr.bf16.mxu0 %v2125
    %2194 = vmatpush2.bf16.msra.mxu0 %v2124
    %2195 = vmatprep.subr.bf16.mxu0 %v2123
    %2196 = vmatpush2.bf16.msra.mxu0 %v2122
    %2197 = vmatprep.subr.bf16.mxu0 %v2121
    %2198 = vmatpush2.bf16.msra.mxu0 %v2120
    %2199 = vmatprep.subr.bf16.mxu0 %v2119
    %2200 = vmatpush2.bf16.msra.mxu0 %v2118
    %2201 = vmatprep.subr.bf16.mxu0 %v2117
    %2202 = vmatpush2.bf16.msra.mxu0 %v2116
    %2203 = vmatprep.subr.bf16.mxu0 %v2115
    %2204 = vmatpush2.bf16.msra.mxu0 %v2114
    %2205 = vmatprep.mubr.bf16.mxu0 %v2033
    %2206 = vmatmul.mubr.bf16.gmra.mxu0 %v2032
    %v2207 = vpop.f32.mrf.mxu0
    %v2208 = vadd.f32 %v2165, %v2207
    %v2209 = vpop.f32.mrf.mxu0
    %v2210 = vadd.f32 %v2167, %v2209
    %v2211 = vpop.f32.mrf.mxu0
    %v2212 = vadd.f32 %v2169, %v2211
    %v2213 = vpop.f32.mrf.mxu0
    %v2214 = vadd.f32 %v2171, %v2213
    %2215 = vdwg.mxu0
    %v2216 = vld [vmem:[#allocation13] sm:$0x3]
    %v2218 = vlaneseq
    %v2219 = vshrl.u32 %v2218, 7
    %v2220 = vsub.s32 0, %v2219
    %v2221 = vrot.slane %v2216, %v2220
    %v2222 = vlaneseq
    %v2223 = vshrl.u32 %v2222, 7
    %v2224 = vsub.s32 1, %v2223
    %v2225 = vrot.slane %v2216, %v2224
    %v2228 = vmul.f32 %v2208, %v2221
    %v2229 = vmul.f32 %v2210, %v2225
    %v2230 = vmul.f32 %v2212, %v2221
    %v2231 = vmul.f32 %v2214, %v2225
    %v2232 = vld [vmem:[#allocation15] sm:$0x3]
    %v2234 = vlaneseq
    %v2235 = vshrl.u32 %v2234, 7
    %v2236 = vsub.s32 0, %v2235
    %v2237 = vrot.slane %v2232, %v2236
    %v2238 = vlaneseq
    %v2239 = vshrl.u32 %v2238, 7
    %v2240 = vsub.s32 1, %v2239
    %v2241 = vrot.slane %v2232, %v2240
    %v2244 = vadd.f32 %v2228, %v2237
    %v2245 = vadd.f32 %v2229, %v2241
    %v2246 = vadd.f32 %v2230, %v2237
    %v2247 = vadd.f32 %v2231, %v2241
    %v2248 = vmax.f32 %v2244, 0.0
    %v2249 = vmax.f32 %v2245, 0.0
    %v2250 = vmax.f32 %v2246, 0.0
    %v2251 = vmax.f32 %v2247, 0.0
    %v2252 = vpack.c.bf16 %v2250, %v2248
    %v2253 = vpack.c.bf16 %v2251, %v2249
    %v2254 = vld [vmem:[#allocation16] sm:$0xff]
    %v2255 = vld [vmem:[#allocation16 + $0x8] sm:$0xff]
    %v2256 = vld [vmem:[#allocation16 + $0x10] sm:$0xff]
    %v2257 = vld [vmem:[#allocation16 + $0x18] sm:$0xff]
    %v2258 = vld [vmem:[#allocation16 + $0x20] sm:$0xff]
    %v2259 = vld [vmem:[#allocation16 + $0x28] sm:$0xff]
    %v2260 = vld [vmem:[#allocation16 + $0x30] sm:$0xff]
    %v2261 = vld [vmem:[#allocation16 + $0x38] sm:$0xff]
    %v2262 = vunpack.c.l.s8.bf16 %v2254
    %v2263 = vunpack.c.h.s8.bf16 %v2254
    %v2264 = vunpack.c.l.s8.bf16 %v2255
    %v2265 = vunpack.c.h.s8.bf16 %v2255
    %v2266 = vunpack.c.l.s8.bf16 %v2256
    %v2267 = vunpack.c.h.s8.bf16 %v2256
    %v2268 = vunpack.c.l.s8.bf16 %v2257
    %v2269 = vunpack.c.h.s8.bf16 %v2257
    %v2270 = vunpack.c.l.s8.bf16 %v2258
    %v2271 = vunpack.c.h.s8.bf16 %v2258
    %v2272 = vunpack.c.l.s8.bf16 %v2259
    %v2273 = vunpack.c.h.s8.bf16 %v2259
    %v2274 = vunpack.c.l.s8.bf16 %v2260
    %v2275 = vunpack.c.h.s8.bf16 %v2260
    %v2276 = vunpack.c.l.s8.bf16 %v2261
    %v2277 = vunpack.c.h.s8.bf16 %v2261
    %2278 = vmatprep.subr.bf16.mxu0 0
    %2279 = vmatpush1.bf16.msra.mxu0 %v2269
    %2280 = vmatprep.subr.bf16.mxu0 0
    %2281 = vmatpush1.bf16.msra.mxu0 %v2268
    %2282 = vmatprep.subr.bf16.mxu0 0
    %2283 = vmatpush1.bf16.msra.mxu0 %v2267
    %2284 = vmatprep.subr.bf16.mxu0 0
    %2285 = vmatpush1.bf16.msra.mxu0 %v2266
    %2286 = vmatprep.subr.bf16.mxu0 0
    %2287 = vmatpush1.bf16.msra.mxu0 %v2265
    %2288 = vmatprep.subr.bf16.mxu0 0
    %2289 = vmatpush1.bf16.msra.mxu0 %v2264
    %2290 = vmatprep.subr.bf16.mxu0 0
    %2291 = vmatpush1.bf16.msra.mxu0 %v2263
    %2292 = vmatprep.subr.bf16.mxu0 0
    %2293 = vmatpush1.bf16.msra.mxu0 %v2262
    %2294 = vmatprep.subr.bf16.mxu0 0
    %2295 = vmatpush2.bf16.msra.mxu0 %v2277
    %2296 = vmatprep.subr.bf16.mxu0 0
    %2297 = vmatpush2.bf16.msra.mxu0 %v2276
    %2298 = vmatprep.subr.bf16.mxu0 0
    %2299 = vmatpush2.bf16.msra.mxu0 %v2275
    %2300 = vmatprep.subr.bf16.mxu0 0
    %2301 = vmatpush2.bf16.msra.mxu0 %v2274
    %2302 = vmatprep.subr.bf16.mxu0 0
    %2303 = vmatpush2.bf16.msra.mxu0 %v2273
    %2304 = vmatprep.subr.bf16.mxu0 0
    %2305 = vmatpush2.bf16.msra.mxu0 %v2272
    %2306 = vmatprep.subr.bf16.mxu0 0
    %2307 = vmatpush2.bf16.msra.mxu0 %v2271
    %2308 = vmatprep.subr.bf16.mxu0 0
    %2309 = vmatpush2.bf16.msra.mxu0 %v2270
    %2310 = vmatprep.mubr.bf16.mxu0 %v2253
    %2311 = vmatmul.mubr.bf16.gmra.mxu0 %v2252
    %v2312 = vpop.f32.mrf.mxu0
    %v2313 = vadd.f32 0.0, %v2312
    %v2314 = vpop.f32.mrf.mxu0
    %v2315 = vpop.f32.mrf.mxu0
    %v2316 = vadd.f32 0.0, %v2315
    %v2317 = vpop.f32.mrf.mxu0
    %2318 = vdwg.mxu0
    %v2319 = vld [vmem:[%s14] sm:$0x1]
    %v2321 = vlaneseq
    %v2322 = vshrl.u32 %v2321, 7
    %v2323 = vsub.s32 0, %v2322
    %v2324 = vrot.slane %v2319, %v2323
    %v2326 = vmul.f32 %v2313, %v2324
    %v2327 = vmul.f32 %v2316, %v2324
    %v2328 = vld [vmem:[#allocation18] sm:$0x1]
    %v2330 = vlaneseq
    %v2331 = vshrl.u32 %v2330, 7
    %v2332 = vsub.s32 0, %v2331
    %v2333 = vrot.slane %v2328, %v2332
    %v2335 = vadd.f32 %v2326, %v2333
    %v2336 = vadd.f32 %v2327, %v2333
    %v2337 = vlaneseq
    %v2338 = vand.u32 %v2337, 127
    %vm2339 = vcmp.lt.s32.totalorder %v2338, 16
    %vm2340 = vcmp.eq.s32.totalorder %v2338, 16
    %vm2341 = vcmp.gt.s32.totalorder %v2338, 16
    %vm2342 = vcmp.lt.s32.totalorder %v2338, 33
    %vm2343 = vmand %vm2341, %vm2342
    %v2344 = vsel %vm2339, %v2335, -1e+30
    %v2345 = vsel %vm2339, %v2336, -1e+30
    %2346 = vmax.xlane.f32.xlu0 %v2344
    %v2347 = vpop.xlane.xlu0 %2346
    %2348 = vmax.xlane.f32.xlu0 %v2345
    %v2349 = vpop.xlane.xlu0 %2348
    %v2350 = vsub.f32 %v2344, %v2347
    %v2351 = vsub.f32 %v2345, %v2349
    %v2352 = vmul.f32 %v2350, 1.442695
    %v2353 = vpow.pop %v2352
    %v2354 = vmul.f32 %v2351, 1.442695
    %v2355 = vpow.pop %v2354
    %2356 = vadd.xlane.f32.xlu0 %v2353
    %v2357 = vpop.xlane.xlu0 %2356
    %2358 = vadd.xlane.f32.xlu0 %v2355
    %v2359 = vpop.xlane.xlu0 %2358
    %v2360 = vrcp.pop %v2357
    %v2361 = vmul.f32 1.0, %v2360
    %v2362 = vrcp.pop %v2359
    %v2363 = vmul.f32 1.0, %v2362
    %v2364 = vlog2.pop %v2357
    %v2365 = vmul.f32 %v2364, 0.6931472
    %v2366 = vlog2.pop %v2359
    %v2367 = vmul.f32 %v2366, 0.6931472
    %v2368 = vadd.f32 %v2347, %v2365
    %v2369 = vadd.f32 %v2349, %v2367
    %v2370 = vmul.f32 %v2353, %v2361
    %v2371 = vmul.f32 %v2355, %v2363
    %v2372 = vsel %vm2339, %v2370, 0.0
    %v2373 = vsel %vm2339, %v2371, 0.0
    %v2374 = vsel %vm2340, %v2335, %v2372
    %v2375 = vsel %vm2340, %v2336, %v2373
    %v2376 = vsub.f32 %v2335, %v2368
    %v2377 = vsub.f32 %v2336, %v2369
    %v2378 = vsel %vm2343, %v2376, %v2374
    %v2379 = vsel %vm2343, %v2377, %v2375
    %2380 = vst [vmem:[%s16] sm:$0xff] %v2378
    %2381 = vst [vmem:[%s16 + $0x8] sm:$0xff] %v2379
    // Predicated region
    $region110: #{actor_critic_forward.1} parent=1 // pred_check
      _
    $region111: #{actor_critic_forward.1} parent=1 // pred_check_branch
      %2383 = sbr.rel (0) target = $region113
    $region112: #{actor_critic_forward.1} parent=1 // pred_region
      _
    $region113: #{actor_critic_forward.1} parent=1 // pred_fallthru
      _
    // Predicated region
    $region114: #{actor_critic_forward.1} parent=1 // pred_check
      _
    $region115: #{actor_critic_forward.1} parent=1 // pred_check_branch
      %2385 = sbr.rel (0) target = $region117
    $region116: #{actor_critic_forward.1} parent=1 // pred_region
      _
    $region117: #{actor_critic_forward.1} parent=1 // pred_fallthru
      _
    %2386 = vsyncpa [#allocation3], 1
    %2387 = vsyncpa [#allocation5], 1
    %2388 = vsyncpa [#allocation8], 1
    %2389 = vsyncpa [#allocation11], 1
    %2390 = vsyncpa [#allocation14], 1
    %2391 = vsyncpa [#allocation17], 1

</llo_original>
